<compile_context>
chip_gen: v6e
topology: v6e:2x2x1
jax: 0.10.0
libtpu: 0.0.40
codegen_flags: <defaults>
</compile_context>

<pallas_src>
import jax
import jax.numpy as jnp
from jax.experimental import pallas as pl
from jax.experimental.pallas import tpu as pltpu  # noqa: F401  (kept for easy extension)

# ----------------------------- configuration (small shapes) -----------------------------
N_NODES = 16                      # num_nodes
NUM_FEATURES = 32                 # data.x feature dim
HIDDEN = 32                       # args.hidden_channels
MAX_HASH_HOPS = 2                 # args.max_hash_hops == num_layers
DIM = MAX_HASH_HOPS * (MAX_HASH_HOPS + 2)   # 8 = structure-feature ("label") dim
NUM_PERM = 128                    # args.minhash_num_perm
HLL_P = 4
HLL_SIZE = 2 ** HLL_P             # 16 registers
HLL_ALPHA = 0.673                 # standard HLL alpha for m = 16
N_LINKS = 8                       # batch of candidate links for the predictor
BN_EPS = 1e-5
LANE_PAD = 128                    # lane-dense padding for narrow outputs / final Linear


def _lane_pad(v, width=LANE_PAD):
    """Pad the minor (lane) dim of a 2-D value to `width` with one 2-way concat."""
    r, c = v.shape
    if c == width:
        return v
    return jnp.concatenate([v, jnp.zeros((r, width - c), v.dtype)], axis=1)


# ------------------------------------ fused Pallas kernel ------------------------------------
def fused_elph_kernel(
    # ---- inputs (all whole-array VMEM blocks) ----
    x_ref,            # (N, F)   raw node features
    a_ref,            # (N, N)   GCN-normalised adjacency (dst-major)
    mask_ref,         # (N, N)   {0,1} hash-prop mask, mask[dst, src], includes self-loops
    mh0_ref,          # (N, P)   int32 initial minhash signatures
    hll0_ref,         # (N, R)   int32 initial HLL registers
    enc_w_ref, enc_b_ref,        # feature_encoder
    conv_w_ref, conv_b_ref,      # (K, H, H), (K, 1, H) stacked GCNConv weights
    sf_ref,           # (B, DIM) structure features for candidate links
    sel_ref,          # (2B, N)  stacked one-hot gather matrix: rows [0,B)=src, [B,2B)=dst
    lab_w_ref, lab_b_ref,        # label_lin_layer with BN folded in
    out_w_ref, out_b_ref,        # lin_out with BN folded in
    fin_w_ref, fin_b_ref,        # final Linear, padded to LANE_PAD output lanes
    # ---- outputs (all lane-dense) ----
    x_out_ref,        # (N, LANE_PAD)            real values in lanes [0, HIDDEN)
    mh_out_ref,       # (K, N, P) int32          P = 128 lanes, already dense
    hll_out_ref,      # (N, LANE_PAD) int32      lanes [k*R, (k+1)*R) = hop k+1 registers
    cards_out_ref,    # (N, LANE_PAD)            real values in lanes [0, K)
    probs_out_ref,    # (B, LANE_PAD)            real values in lane 0
):
    n = x_ref.shape[0]

    # ---------------- feature path, hop 0: feature_encoder (dropout = identity) ----------------
    x_h = (jnp.dot(x_ref[...], enc_w_ref[...], preferred_element_type=jnp.float32)
           + enc_b_ref[...])

    # ---------------- hash path state ----------------
    mh = mh0_ref[...]                      # (N, P) int32
    hll = hll0_ref[...]                    # (N, R) int32
    msk = mask_ref[...] > 0.0              # (N_dst, N_src) bool — compare hoisted out of loops
    big = jnp.int32(2 ** 31 - 1)           # sentinel for min (self-loop guarantees a real hit)
    # NOTE: 0 is a valid masked-out sentinel for the HLL max only because registers are >= 0.

    # hoisted per-source select masks, broadcast ONCE per lane width (P for minhash, R for HLL)
    # and reused across both hops and both selects (JAX does not CSE broadcast_in_dim).
    sel_p = [jnp.broadcast_to(msk[:, s:s + 1], (n, NUM_PERM)) for s in range(n)]
    sel_r = [jnp.broadcast_to(msk[:, s:s + 1], (n, HLL_SIZE)) for s in range(n)]

    cards_cols = []
    hll_hops = []
    for k in range(MAX_HASH_HOPS):
        # ---- one hop of minhash (min) / HLL (max) propagation, full-width over destinations ----
        mh_acc = jnp.full(mh.shape, big, jnp.int32)
        hll_acc = jnp.zeros(hll.shape, jnp.int32)
        for s in range(n):                               # static unroll over sources (N small)
            mh_acc = jnp.where(sel_p[s], jnp.minimum(mh_acc, mh[s:s + 1, :]), mh_acc)
            hll_acc = jnp.where(sel_r[s], jnp.maximum(hll_acc, hll[s:s + 1, :]), hll_acc)
        mh, hll = mh_acc, hll_acc
        mh_out_ref[k] = mh                               # (N, 128) — already lane-dense
        hll_hops.append(hll)                             # deferred to one packed store below

        # ---- raw HyperLogLog estimate for all rows at once (see TODO(synk)) ----
        denom = jnp.sum(jnp.exp2(-hll.astype(jnp.float32)), axis=1, keepdims=True)   # (N, 1)
        cards_cols.append((HLL_ALPHA * float(HLL_SIZE) * float(HLL_SIZE)) / denom)

        # ---- feature path, hop k: residual GCN (eval dropout = identity) ----
        h = jnp.dot(x_h, conv_w_ref[k], preferred_element_type=jnp.float32)
        agg = jnp.dot(a_ref[...], h, preferred_element_type=jnp.float32) + conv_b_ref[k]
        x_h = x_h + jnp.maximum(agg, 0.0)

    # ---------------- lane-dense full-width stores (no masked partial stores) ----------------
    x_out_ref[...] = _lane_pad(x_h)
    hll_out_ref[...] = _lane_pad(jnp.concatenate(hll_hops, axis=1))          # (N, K*R) -> 128
    cards_out_ref[...] = _lane_pad(jnp.concatenate(cards_cols, axis=1))      # (N, K)   -> 128

    # ---------------- LinkPredictorELPH (BN folded, dropouts identity in eval) ----------------
    sf = (jnp.dot(sf_ref[...], lab_w_ref[...], preferred_element_type=jnp.float32)
          + lab_b_ref[...])
    sf = jnp.maximum(sf, 0.0)                                         # label_lin -> bn -> relu

    b = sel_ref.shape[0] // 2
    f = jnp.dot(sel_ref[...], x_h, preferred_element_type=jnp.float32)   # (2B, H): one gather
    h = f[:b, :] * f[b:, :]                                           # hadamard of endpoints
    h = jnp.dot(h, out_w_ref[...], preferred_element_type=jnp.float32) + out_b_ref[...]
    h = jnp.maximum(h, 0.0)                                           # lin_out -> bn -> relu

    logits = (jnp.dot(sf, fin_w_ref[:DIM, :], preferred_element_type=jnp.float32)
              + jnp.dot(h, fin_w_ref[DIM:, :], preferred_element_type=jnp.float32)
              + fin_b_ref[...])                                       # lin(cat([sf, h]))
    probs_out_ref[...] = jax.nn.sigmoid(logits)                       # (B, LANE_PAD) dense store


# ---------------------------------------- glue ------------------------------------------
def gcn_normalized_adjacency(edge_index, n):
    """D^{-1/2} (A + I) D^{-1/2} with A[dst, src] = 1 (GCNConv normalize=True)."""
    src, dst = edge_index
    a = jnp.zeros((n, n), jnp.float32).at[dst, src].add(1.0)
    a = jnp.minimum(a, 1.0)
    a_hat = a + jnp.eye(n, dtype=jnp.float32)
    deg = jnp.sum(a_hat, axis=1)
    d_inv_sqrt = jnp.where(deg > 0, 1.0 / jnp.sqrt(deg), 0.0)
    return d_inv_sqrt[:, None] * a_hat * d_inv_sqrt[None, :]


def hash_prop_mask_dst_major(edge_index, n):
    """mask[dst, src] = 1 for edges of add_self_loops(edge_index)."""
    src, dst = edge_index
    m = jnp.zeros((n, n), jnp.float32).at[dst, src].add(1.0)
    return jnp.minimum(jnp.minimum(m, 1.0) + jnp.eye(n, dtype=jnp.float32), 1.0)


def init_params(key):
    ks = jax.random.split(key, 8)

    def lin(k, fan_in, fan_out):
        kw, kb = jax.random.split(k)
        bound = 1.0 / jnp.sqrt(jnp.float32(fan_in))
        w = jax.random.uniform(kw, (fan_in, fan_out), jnp.float32, -bound, bound)
        b = jax.random.uniform(kb, (1, fan_out), jnp.float32, -bound, bound)
        return w, b

    p = {}
    p["enc_w"], p["enc_b"] = lin(ks[0], NUM_FEATURES, HIDDEN)        # feature_encoder
    p["conv_w"], p["conv_b"] = [], []
    for i in range(MAX_HASH_HOPS):                                    # GCNConv weights
        w, b = lin(ks[1 + i], HIDDEN, HIDDEN)
        p["conv_w"].append(w)
        p["conv_b"].append(b)
    # LinkPredictorELPH (use_feature=True, use_embedding=False)
    p["lab_w"], p["lab_b"] = lin(ks[4], DIM, DIM)                     # label_lin_layer
    p["out_w"], p["out_b"] = lin(ks[5], HIDDEN, HIDDEN)               # lin_out
    p["fin_w"], p["fin_b"] = lin(ks[6], DIM + HIDDEN, 1)              # lin
    # BatchNorm1d (eval-mode running stats)
    p["bn_lab_gamma"] = jnp.ones((1, DIM), jnp.float32)
    p["bn_lab_beta"] = jnp.zeros((1, DIM), jnp.float32)
    p["bn_lab_mean"] = 0.1 * jnp.ones((1, DIM), jnp.float32)
    p["bn_lab_var"] = jnp.full((1, DIM), 1.5, jnp.float32)
    p["bn_ft_gamma"] = jnp.ones((1, HIDDEN), jnp.float32)
    p["bn_ft_beta"] = jnp.zeros((1, HIDDEN), jnp.float32)
    p["bn_ft_mean"] = -0.05 * jnp.ones((1, HIDDEN), jnp.float32)
    p["bn_ft_var"] = jnp.full((1, HIDDEN), 0.8, jnp.float32)
    return p


# ------------------------------------- fused forward -------------------------------------
def elph_forward_fused(x, edge_index, init_minhash, init_hll, sf, link_idx, params):
    """ELPH.forward + LinkPredictorELPH.forward in one pallas_call.

    Returns (x_out, node_hashings_table, cards, probs); node_features for the predictor are
    (x_out[link_idx[0]], x_out[link_idx[1]]), gathered inside the kernel via one-hot matmul.
    """
    n = x.shape[0]
    b = link_idx.shape[1]
    a_norm = gcn_normalized_adjacency(edge_index, n)
    mask_ds = hash_prop_mask_dst_major(edge_index, n)

    # --- fold eval BatchNorm into the preceding Linear weights (trace-time, tiny) ---
    def bn_fold(gamma, beta, mean, var):
        scale = gamma / jnp.sqrt(var + BN_EPS)
        return scale, beta - mean * scale

    sl, tl = bn_fold(params["bn_lab_gamma"], params["bn_lab_beta"],
                     params["bn_lab_mean"], params["bn_lab_var"])
    lab_w = params["lab_w"] * sl
    lab_b = params["lab_b"] * sl + tl
    sfe, tfe = bn_fold(params["bn_ft_gamma"], params["bn_ft_beta"],
                       params["bn_ft_mean"], params["bn_ft_var"])
    out_w = params["out_w"] * sfe
    out_b = params["out_b"] * sfe + tfe

    conv_w = jnp.stack(params["conv_w"])                      # (K, H, H)
    conv_b = jnp.stack(params["conv_b"])                      # (K, 1, H)

    # final Linear padded to 128 output lanes (lane-dense store; extra lanes discarded)
    fin_w_pad = jnp.zeros((DIM + HIDDEN, LANE_PAD), jnp.float32).at[:, :1].set(params["fin_w"])
    fin_b_pad = jnp.zeros((1, LANE_PAD), jnp.float32).at[:, :1].set(params["fin_b"])

    # one stacked one-hot endpoint-gather matrix (single MXU launch inside the kernel)
    sel = jnp.concatenate([jax.nn.one_hot(link_idx[0], n, dtype=jnp.float32),
                           jax.nn.one_hot(link_idx[1], n, dtype=jnp.float32)], axis=0)  # (2B, N)

    out_shapes = (
        jax.ShapeDtypeStruct((n, LANE_PAD), jnp.float32),                      # x_out (padded)
        jax.ShapeDtypeStruct((MAX_HASH_HOPS, n, NUM_PERM), jnp.int32),         # minhash per hop
        jax.ShapeDtypeStruct((n, LANE_PAD), jnp.int32),                        # hll (packed hops)
        jax.ShapeDtypeStruct((n, LANE_PAD), jnp.float32),                      # cards (padded)
        jax.ShapeDtypeStruct((b, LANE_PAD), jnp.float32),                      # probs (padded)
    )

    x_pad, mh_out, hll_pack, cards_pad, probs_pad = pl.pallas_call(
        fused_elph_kernel,
        out_shape=out_shapes,
    )(x, a_norm, mask_ds, init_minhash, init_hll,
      params["enc_w"], params["enc_b"], conv_w, conv_b,
      sf, sel,
      lab_w, lab_b, out_w, out_b, fin_w_pad, fin_b_pad)

    x_out = x_pad[:, :HIDDEN]
    cards = cards_pad[:, :MAX_HASH_HOPS]
    probs = probs_pad[:, :1]
    node_hashings_table = {0: {"minhash": init_minhash, "hll": init_hll}}
    for k in range(1, MAX_HASH_HOPS + 1):
        node_hashings_table[k] = {
            "minhash": mh_out[k - 1],
            "hll": hll_pack[:, (k - 1) * HLL_SIZE:k * HLL_SIZE],
        }
    return x_out, node_hashings_table, cards, probs


# ------------------------------------------ main ------------------------------------------
if __name__ == "__main__":
    key = jax.random.PRNGKey(0)
    k_x, k_mh, k_hll, k_sf, k_p = jax.random.split(key, 5)

    x = jax.random.normal(k_x, (N_NODES, NUM_FEATURES), jnp.float32)

    # deterministic undirected graph: ring + a few chords, stored as edge_index [2, E]
    ring_src = jnp.arange(N_NODES, dtype=jnp.int32)
    ring_dst = (ring_src + 1) % N_NODES
    chords = jnp.array([[0, 5], [3, 12], [7, 14], [2, 9]], dtype=jnp.int32).T
    src = jnp.concatenate([ring_src, ring_dst, chords[0], chords[1]])
    dst = jnp.concatenate([ring_dst, ring_src, chords[1], chords[0]])
    edge_index = jnp.stack([src, dst])                                # (2, 40)

    # synthetic ElphHashes.initialise_minhash / initialise_hll (see TODO(synk) notes above)
    init_minhash = jax.random.randint(k_mh, (N_NODES, NUM_PERM), 0, 2 ** 30, jnp.int32)
    init_hll = jax.random.randint(k_hll, (N_NODES, HLL_SIZE), 0, 20, jnp.int32)

    params = init_params(k_p)

    # candidate links for the predictor: first N_LINKS edges; structure features synthetic
    sf = jax.random.normal(k_sf, (N_LINKS, DIM), jnp.float32)
    link_idx = edge_index[:, :N_LINKS]                                # (2, B)

    x_out, tables, cards, probs = elph_forward_fused(
        x, edge_index, init_minhash, init_hll, sf, link_idx, params)

    jax.block_until_ready((x_out, tables, cards, probs))
    assert x_out.shape == (N_NODES, HIDDEN)
    assert cards.shape == (N_NODES, MAX_HASH_HOPS)
    assert tables[MAX_HASH_HOPS]["minhash"].shape == (N_NODES, NUM_PERM)
    assert tables[MAX_HASH_HOPS]["hll"].shape == (N_NODES, HLL_SIZE)
    assert probs.shape == (N_LINKS, 1)
    print("KERNEL_OK")
</pallas_src>

<mosaic_0001>
module attributes {stable_mosaic.version = 11 : i64} {
  func.func @fused_elph_kernel(%arg0: memref<16x32xf32, #tpu.memory_space<vmem>>, %arg1: memref<16x16xf32, #tpu.memory_space<vmem>>, %arg2: memref<16x16xf32, #tpu.memory_space<vmem>>, %arg3: memref<16x128xi32, #tpu.memory_space<vmem>>, %arg4: memref<16x16xi32, #tpu.memory_space<vmem>>, %arg5: memref<32x32xf32, #tpu.memory_space<vmem>>, %arg6: memref<1x32xf32, #tpu.memory_space<vmem>>, %arg7: memref<2x32x32xf32, #tpu.memory_space<vmem>>, %arg8: memref<2x1x32xf32, #tpu.memory_space<vmem>>, %arg9: memref<8x8xf32, #tpu.memory_space<vmem>>, %arg10: memref<16x16xf32, #tpu.memory_space<vmem>>, %arg11: memref<8x8xf32, #tpu.memory_space<vmem>>, %arg12: memref<1x8xf32, #tpu.memory_space<vmem>>, %arg13: memref<32x32xf32, #tpu.memory_space<vmem>>, %arg14: memref<1x32xf32, #tpu.memory_space<vmem>>, %arg15: memref<40x128xf32, #tpu.memory_space<vmem>>, %arg16: memref<1x128xf32, #tpu.memory_space<vmem>>, %arg17: memref<16x128xf32, #tpu.memory_space<vmem>>, %arg18: memref<2x16x128xi32, #tpu.memory_space<vmem>>, %arg19: memref<16x128xi32, #tpu.memory_space<vmem>>, %arg20: memref<16x128xf32, #tpu.memory_space<vmem>>, %arg21: memref<8x128xf32, #tpu.memory_space<vmem>>) attributes {dimension_semantics = [], scalar_prefetch = 0 : i64, scratch_operands = 0 : i64, tpu.core_type = #tpu.core_type<tc>} {
    %c0 = arith.constant 0 : index
    %c0_0 = arith.constant 0 : index
    %0 = vector.load %arg0[%c0, %c0_0] : memref<16x32xf32, #tpu.memory_space<vmem>>, vector<16x32xf32>
    %c0_1 = arith.constant 0 : index
    %c0_2 = arith.constant 0 : index
    %1 = vector.load %arg5[%c0_1, %c0_2] : memref<32x32xf32, #tpu.memory_space<vmem>>, vector<32x32xf32>
    %cst = arith.constant dense<0.000000e+00> : vector<16x32xf32>
    %2 = tpu.matmul %0, %1, %cst {dimension_numbers = #tpu.dot_dimension_numbers<[1], [0], [0], [1], [0, 0, 1, 1], [], []>} : vector<16x32xf32>, vector<32x32xf32>, vector<16x32xf32> -> vector<16x32xf32>
    %c0_3 = arith.constant 0 : index
    %c0_4 = arith.constant 0 : index
    %3 = vector.load %arg6[%c0_3, %c0_4] : memref<1x32xf32, #tpu.memory_space<vmem>>, vector<1x32xf32>
    %4 = vector.broadcast %3 : vector<1x32xf32> to vector<16x32xf32>
    %5 = arith.addf %2, %4 : vector<16x32xf32>
    %c0_5 = arith.constant 0 : index
    %c0_6 = arith.constant 0 : index
    %6 = vector.load %arg3[%c0_5, %c0_6] : memref<16x128xi32, #tpu.memory_space<vmem>>, vector<16x128xi32>
    %c0_7 = arith.constant 0 : index
    %c0_8 = arith.constant 0 : index
    %7 = vector.load %arg4[%c0_7, %c0_8] : memref<16x16xi32, #tpu.memory_space<vmem>>, vector<16x16xi32>
    %c0_9 = arith.constant 0 : index
    %c0_10 = arith.constant 0 : index
    %8 = vector.load %arg2[%c0_9, %c0_10] : memref<16x16xf32, #tpu.memory_space<vmem>>, vector<16x16xf32>
    %cst_11 = arith.constant 0.000000e+00 : f32
    %9 = vector.broadcast %cst_11 : f32 to vector<16x16xf32>
    %10 = arith.cmpf ogt, %8, %9 : vector<16x16xf32>
    %11 = vector.extract_strided_slice %10 {offsets = [0, 0], sizes = [16, 1], strides = [1, 1]} : vector<16x16xi1> to vector<16x1xi1>
    %12 = vector.shape_cast %11 : vector<16x1xi1> to vector<16x1xi1>
    %13 = vector.broadcast %12 : vector<16x1xi1> to vector<16x128xi1>
    %14 = vector.extract_strided_slice %10 {offsets = [0, 1], sizes = [16, 1], strides = [1, 1]} : vector<16x16xi1> to vector<16x1xi1>
    %15 = vector.shape_cast %14 : vector<16x1xi1> to vector<16x1xi1>
    %16 = vector.broadcast %15 : vector<16x1xi1> to vector<16x128xi1>
    %17 = vector.extract_strided_slice %10 {offsets = [0, 2], sizes = [16, 1], strides = [1, 1]} : vector<16x16xi1> to vector<16x1xi1>
    %18 = vector.shape_cast %17 : vector<16x1xi1> to vector<16x1xi1>
    %19 = vector.broadcast %18 : vector<16x1xi1> to vector<16x128xi1>
    %20 = vector.extract_strided_slice %10 {offsets = [0, 3], sizes = [16, 1], strides = [1, 1]} : vector<16x16xi1> to vector<16x1xi1>
    %21 = vector.shape_cast %20 : vector<16x1xi1> to vector<16x1xi1>
    %22 = vector.broadcast %21 : vector<16x1xi1> to vector<16x128xi1>
    %23 = vector.extract_strided_slice %10 {offsets = [0, 4], sizes = [16, 1], strides = [1, 1]} : vector<16x16xi1> to vector<16x1xi1>
    %24 = vector.shape_cast %23 : vector<16x1xi1> to vector<16x1xi1>
    %25 = vector.broadcast %24 : vector<16x1xi1> to vector<16x128xi1>
    %26 = vector.extract_strided_slice %10 {offsets = [0, 5], sizes = [16, 1], strides = [1, 1]} : vector<16x16xi1> to vector<16x1xi1>
    %27 = vector.shape_cast %26 : vector<16x1xi1> to vector<16x1xi1>
    %28 = vector.broadcast %27 : vector<16x1xi1> to vector<16x128xi1>
    %29 = vector.extract_strided_slice %10 {offsets = [0, 6], sizes = [16, 1], strides = [1, 1]} : vector<16x16xi1> to vector<16x1xi1>
    %30 = vector.shape_cast %29 : vector<16x1xi1> to vector<16x1xi1>
    %31 = vector.broadcast %30 : vector<16x1xi1> to vector<16x128xi1>
    %32 = vector.extract_strided_slice %10 {offsets = [0, 7], sizes = [16, 1], strides = [1, 1]} : vector<16x16xi1> to vector<16x1xi1>
    %33 = vector.shape_cast %32 : vector<16x1xi1> to vector<16x1xi1>
    %34 = vector.broadcast %33 : vector<16x1xi1> to vector<16x128xi1>
    %35 = vector.extract_strided_slice %10 {offsets = [0, 8], sizes = [16, 1], strides = [1, 1]} : vector<16x16xi1> to vector<16x1xi1>
    %36 = vector.shape_cast %35 : vector<16x1xi1> to vector<16x1xi1>
    %37 = vector.broadcast %36 : vector<16x1xi1> to vector<16x128xi1>
    %38 = vector.extract_strided_slice %10 {offsets = [0, 9], sizes = [16, 1], strides = [1, 1]} : vector<16x16xi1> to vector<16x1xi1>
    %39 = vector.shape_cast %38 : vector<16x1xi1> to vector<16x1xi1>
    %40 = vector.broadcast %39 : vector<16x1xi1> to vector<16x128xi1>
    %41 = vector.extract_strided_slice %10 {offsets = [0, 10], sizes = [16, 1], strides = [1, 1]} : vector<16x16xi1> to vector<16x1xi1>
    %42 = vector.shape_cast %41 : vector<16x1xi1> to vector<16x1xi1>
    %43 = vector.broadcast %42 : vector<16x1xi1> to vector<16x128xi1>
    %44 = vector.extract_strided_slice %10 {offsets = [0, 11], sizes = [16, 1], strides = [1, 1]} : vector<16x16xi1> to vector<16x1xi1>
    %45 = vector.shape_cast %44 : vector<16x1xi1> to vector<16x1xi1>
    %46 = vector.broadcast %45 : vector<16x1xi1> to vector<16x128xi1>
    %47 = vector.extract_strided_slice %10 {offsets = [0, 12], sizes = [16, 1], strides = [1, 1]} : vector<16x16xi1> to vector<16x1xi1>
    %48 = vector.shape_cast %47 : vector<16x1xi1> to vector<16x1xi1>
    %49 = vector.broadcast %48 : vector<16x1xi1> to vector<16x128xi1>
    %50 = vector.extract_strided_slice %10 {offsets = [0, 13], sizes = [16, 1], strides = [1, 1]} : vector<16x16xi1> to vector<16x1xi1>
    %51 = vector.shape_cast %50 : vector<16x1xi1> to vector<16x1xi1>
    %52 = vector.broadcast %51 : vector<16x1xi1> to vector<16x128xi1>
    %53 = vector.extract_strided_slice %10 {offsets = [0, 14], sizes = [16, 1], strides = [1, 1]} : vector<16x16xi1> to vector<16x1xi1>
    %54 = vector.shape_cast %53 : vector<16x1xi1> to vector<16x1xi1>
    %55 = vector.broadcast %54 : vector<16x1xi1> to vector<16x128xi1>
    %56 = vector.extract_strided_slice %10 {offsets = [0, 15], sizes = [16, 1], strides = [1, 1]} : vector<16x16xi1> to vector<16x1xi1>
    %57 = vector.shape_cast %56 : vector<16x1xi1> to vector<16x1xi1>
    %58 = vector.broadcast %57 : vector<16x1xi1> to vector<16x128xi1>
    %59 = vector.extract_strided_slice %10 {offsets = [0, 0], sizes = [16, 1], strides = [1, 1]} : vector<16x16xi1> to vector<16x1xi1>
    %60 = vector.shape_cast %59 : vector<16x1xi1> to vector<16x1xi1>
    %61 = vector.broadcast %60 : vector<16x1xi1> to vector<16x16xi1>
    %62 = vector.extract_strided_slice %10 {offsets = [0, 1], sizes = [16, 1], strides = [1, 1]} : vector<16x16xi1> to vector<16x1xi1>
    %63 = vector.shape_cast %62 : vector<16x1xi1> to vector<16x1xi1>
    %64 = vector.broadcast %63 : vector<16x1xi1> to vector<16x16xi1>
    %65 = vector.extract_strided_slice %10 {offsets = [0, 2], sizes = [16, 1], strides = [1, 1]} : vector<16x16xi1> to vector<16x1xi1>
    %66 = vector.shape_cast %65 : vector<16x1xi1> to vector<16x1xi1>
    %67 = vector.broadcast %66 : vector<16x1xi1> to vector<16x16xi1>
    %68 = vector.extract_strided_slice %10 {offsets = [0, 3], sizes = [16, 1], strides = [1, 1]} : vector<16x16xi1> to vector<16x1xi1>
    %69 = vector.shape_cast %68 : vector<16x1xi1> to vector<16x1xi1>
    %70 = vector.broadcast %69 : vector<16x1xi1> to vector<16x16xi1>
    %71 = vector.extract_strided_slice %10 {offsets = [0, 4], sizes = [16, 1], strides = [1, 1]} : vector<16x16xi1> to vector<16x1xi1>
    %72 = vector.shape_cast %71 : vector<16x1xi1> to vector<16x1xi1>
    %73 = vector.broadcast %72 : vector<16x1xi1> to vector<16x16xi1>
    %74 = vector.extract_strided_slice %10 {offsets = [0, 5], sizes = [16, 1], strides = [1, 1]} : vector<16x16xi1> to vector<16x1xi1>
    %75 = vector.shape_cast %74 : vector<16x1xi1> to vector<16x1xi1>
    %76 = vector.broadcast %75 : vector<16x1xi1> to vector<16x16xi1>
    %77 = vector.extract_strided_slice %10 {offsets = [0, 6], sizes = [16, 1], strides = [1, 1]} : vector<16x16xi1> to vector<16x1xi1>
    %78 = vector.shape_cast %77 : vector<16x1xi1> to vector<16x1xi1>
    %79 = vector.broadcast %78 : vector<16x1xi1> to vector<16x16xi1>
    %80 = vector.extract_strided_slice %10 {offsets = [0, 7], sizes = [16, 1], strides = [1, 1]} : vector<16x16xi1> to vector<16x1xi1>
    %81 = vector.shape_cast %80 : vector<16x1xi1> to vector<16x1xi1>
    %82 = vector.broadcast %81 : vector<16x1xi1> to vector<16x16xi1>
    %83 = vector.extract_strided_slice %10 {offsets = [0, 8], sizes = [16, 1], strides = [1, 1]} : vector<16x16xi1> to vector<16x1xi1>
    %84 = vector.shape_cast %83 : vector<16x1xi1> to vector<16x1xi1>
    %85 = vector.broadcast %84 : vector<16x1xi1> to vector<16x16xi1>
    %86 = vector.extract_strided_slice %10 {offsets = [0, 9], sizes = [16, 1], strides = [1, 1]} : vector<16x16xi1> to vector<16x1xi1>
    %87 = vector.shape_cast %86 : vector<16x1xi1> to vector<16x1xi1>
    %88 = vector.broadcast %87 : vector<16x1xi1> to vector<16x16xi1>
    %89 = vector.extract_strided_slice %10 {offsets = [0, 10], sizes = [16, 1], strides = [1, 1]} : vector<16x16xi1> to vector<16x1xi1>
    %90 = vector.shape_cast %89 : vector<16x1xi1> to vector<16x1xi1>
    %91 = vector.broadcast %90 : vector<16x1xi1> to vector<16x16xi1>
    %92 = vector.extract_strided_slice %10 {offsets = [0, 11], sizes = [16, 1], strides = [1, 1]} : vector<16x16xi1> to vector<16x1xi1>
    %93 = vector.shape_cast %92 : vector<16x1xi1> to vector<16x1xi1>
    %94 = vector.broadcast %93 : vector<16x1xi1> to vector<16x16xi1>
    %95 = vector.extract_strided_slice %10 {offsets = [0, 12], sizes = [16, 1], strides = [1, 1]} : vector<16x16xi1> to vector<16x1xi1>
    %96 = vector.shape_cast %95 : vector<16x1xi1> to vector<16x1xi1>
    %97 = vector.broadcast %96 : vector<16x1xi1> to vector<16x16xi1>
    %98 = vector.extract_strided_slice %10 {offsets = [0, 13], sizes = [16, 1], strides = [1, 1]} : vector<16x16xi1> to vector<16x1xi1>
    %99 = vector.shape_cast %98 : vector<16x1xi1> to vector<16x1xi1>
    %100 = vector.broadcast %99 : vector<16x1xi1> to vector<16x16xi1>
    %101 = vector.extract_strided_slice %10 {offsets = [0, 14], sizes = [16, 1], strides = [1, 1]} : vector<16x16xi1> to vector<16x1xi1>
    %102 = vector.shape_cast %101 : vector<16x1xi1> to vector<16x1xi1>
    %103 = vector.broadcast %102 : vector<16x1xi1> to vector<16x16xi1>
    %104 = vector.extract_strided_slice %10 {offsets = [0, 15], sizes = [16, 1], strides = [1, 1]} : vector<16x16xi1> to vector<16x1xi1>
    %105 = vector.shape_cast %104 : vector<16x1xi1> to vector<16x1xi1>
    %106 = vector.broadcast %105 : vector<16x1xi1> to vector<16x16xi1>
    %c2147483647_i32 = arith.constant 2147483647 : i32
    %107 = vector.broadcast %c2147483647_i32 : i32 to vector<16x128xi32>
    %c0_i32 = arith.constant 0 : i32
    %108 = vector.broadcast %c0_i32 : i32 to vector<16x16xi32>
    %109 = vector.extract_strided_slice %6 {offsets = [0, 0], sizes = [1, 128], strides = [1, 1]} : vector<16x128xi32> to vector<1x128xi32>
    %110 = vector.broadcast %109 : vector<1x128xi32> to vector<16x128xi32>
    %111 = arith.minsi %107, %110 : vector<16x128xi32>
    %112 = arith.select %13, %111, %107 : vector<16x128xi1>, vector<16x128xi32>
    %113 = vector.extract_strided_slice %7 {offsets = [0, 0], sizes = [1, 16], strides = [1, 1]} : vector<16x16xi32> to vector<1x16xi32>
    %114 = vector.broadcast %113 : vector<1x16xi32> to vector<16x16xi32>
    %115 = arith.maxsi %108, %114 : vector<16x16xi32>
    %116 = arith.select %61, %115, %108 : vector<16x16xi1>, vector<16x16xi32>
    %117 = vector.extract_strided_slice %6 {offsets = [1, 0], sizes = [1, 128], strides = [1, 1]} : vector<16x128xi32> to vector<1x128xi32>
    %118 = vector.broadcast %117 : vector<1x128xi32> to vector<16x128xi32>
    %119 = arith.minsi %112, %118 : vector<16x128xi32>
    %120 = arith.select %16, %119, %112 : vector<16x128xi1>, vector<16x128xi32>
    %121 = vector.extract_strided_slice %7 {offsets = [1, 0], sizes = [1, 16], strides = [1, 1]} : vector<16x16xi32> to vector<1x16xi32>
    %122 = vector.broadcast %121 : vector<1x16xi32> to vector<16x16xi32>
    %123 = arith.maxsi %116, %122 : vector<16x16xi32>
    %124 = arith.select %64, %123, %116 : vector<16x16xi1>, vector<16x16xi32>
    %125 = vector.extract_strided_slice %6 {offsets = [2, 0], sizes = [1, 128], strides = [1, 1]} : vector<16x128xi32> to vector<1x128xi32>
    %126 = vector.broadcast %125 : vector<1x128xi32> to vector<16x128xi32>
    %127 = arith.minsi %120, %126 : vector<16x128xi32>
    %128 = arith.select %19, %127, %120 : vector<16x128xi1>, vector<16x128xi32>
    %129 = vector.extract_strided_slice %7 {offsets = [2, 0], sizes = [1, 16], strides = [1, 1]} : vector<16x16xi32> to vector<1x16xi32>
    %130 = vector.broadcast %129 : vector<1x16xi32> to vector<16x16xi32>
    %131 = arith.maxsi %124, %130 : vector<16x16xi32>
    %132 = arith.select %67, %131, %124 : vector<16x16xi1>, vector<16x16xi32>
    %133 = vector.extract_strided_slice %6 {offsets = [3, 0], sizes = [1, 128], strides = [1, 1]} : vector<16x128xi32> to vector<1x128xi32>
    %134 = vector.broadcast %133 : vector<1x128xi32> to vector<16x128xi32>
    %135 = arith.minsi %128, %134 : vector<16x128xi32>
    %136 = arith.select %22, %135, %128 : vector<16x128xi1>, vector<16x128xi32>
    %137 = vector.extract_strided_slice %7 {offsets = [3, 0], sizes = [1, 16], strides = [1, 1]} : vector<16x16xi32> to vector<1x16xi32>
    %138 = vector.broadcast %137 : vector<1x16xi32> to vector<16x16xi32>
    %139 = arith.maxsi %132, %138 : vector<16x16xi32>
    %140 = arith.select %70, %139, %132 : vector<16x16xi1>, vector<16x16xi32>
    %141 = vector.extract_strided_slice %6 {offsets = [4, 0], sizes = [1, 128], strides = [1, 1]} : vector<16x128xi32> to vector<1x128xi32>
    %142 = vector.broadcast %141 : vector<1x128xi32> to vector<16x128xi32>
    %143 = arith.minsi %136, %142 : vector<16x128xi32>
    %144 = arith.select %25, %143, %136 : vector<16x128xi1>, vector<16x128xi32>
    %145 = vector.extract_strided_slice %7 {offsets = [4, 0], sizes = [1, 16], strides = [1, 1]} : vector<16x16xi32> to vector<1x16xi32>
    %146 = vector.broadcast %145 : vector<1x16xi32> to vector<16x16xi32>
    %147 = arith.maxsi %140, %146 : vector<16x16xi32>
    %148 = arith.select %73, %147, %140 : vector<16x16xi1>, vector<16x16xi32>
    %149 = vector.extract_strided_slice %6 {offsets = [5, 0], sizes = [1, 128], strides = [1, 1]} : vector<16x128xi32> to vector<1x128xi32>
    %150 = vector.broadcast %149 : vector<1x128xi32> to vector<16x128xi32>
    %151 = arith.minsi %144, %150 : vector<16x128xi32>
    %152 = arith.select %28, %151, %144 : vector<16x128xi1>, vector<16x128xi32>
    %153 = vector.extract_strided_slice %7 {offsets = [5, 0], sizes = [1, 16], strides = [1, 1]} : vector<16x16xi32> to vector<1x16xi32>
    %154 = vector.broadcast %153 : vector<1x16xi32> to vector<16x16xi32>
    %155 = arith.maxsi %148, %154 : vector<16x16xi32>
    %156 = arith.select %76, %155, %148 : vector<16x16xi1>, vector<16x16xi32>
    %157 = vector.extract_strided_slice %6 {offsets = [6, 0], sizes = [1, 128], strides = [1, 1]} : vector<16x128xi32> to vector<1x128xi32>
    %158 = vector.broadcast %157 : vector<1x128xi32> to vector<16x128xi32>
    %159 = arith.minsi %152, %158 : vector<16x128xi32>
    %160 = arith.select %31, %159, %152 : vector<16x128xi1>, vector<16x128xi32>
    %161 = vector.extract_strided_slice %7 {offsets = [6, 0], sizes = [1, 16], strides = [1, 1]} : vector<16x16xi32> to vector<1x16xi32>
    %162 = vector.broadcast %161 : vector<1x16xi32> to vector<16x16xi32>
    %163 = arith.maxsi %156, %162 : vector<16x16xi32>
    %164 = arith.select %79, %163, %156 : vector<16x16xi1>, vector<16x16xi32>
    %165 = vector.extract_strided_slice %6 {offsets = [7, 0], sizes = [1, 128], strides = [1, 1]} : vector<16x128xi32> to vector<1x128xi32>
    %166 = vector.broadcast %165 : vector<1x128xi32> to vector<16x128xi32>
    %167 = arith.minsi %160, %166 : vector<16x128xi32>
    %168 = arith.select %34, %167, %160 : vector<16x128xi1>, vector<16x128xi32>
    %169 = vector.extract_strided_slice %7 {offsets = [7, 0], sizes = [1, 16], strides = [1, 1]} : vector<16x16xi32> to vector<1x16xi32>
    %170 = vector.broadcast %169 : vector<1x16xi32> to vector<16x16xi32>
    %171 = arith.maxsi %164, %170 : vector<16x16xi32>
    %172 = arith.select %82, %171, %164 : vector<16x16xi1>, vector<16x16xi32>
    %173 = vector.extract_strided_slice %6 {offsets = [8, 0], sizes = [1, 128], strides = [1, 1]} : vector<16x128xi32> to vector<1x128xi32>
    %174 = vector.broadcast %173 : vector<1x128xi32> to vector<16x128xi32>
    %175 = arith.minsi %168, %174 : vector<16x128xi32>
    %176 = arith.select %37, %175, %168 : vector<16x128xi1>, vector<16x128xi32>
    %177 = vector.extract_strided_slice %7 {offsets = [8, 0], sizes = [1, 16], strides = [1, 1]} : vector<16x16xi32> to vector<1x16xi32>
    %178 = vector.broadcast %177 : vector<1x16xi32> to vector<16x16xi32>
    %179 = arith.maxsi %172, %178 : vector<16x16xi32>
    %180 = arith.select %85, %179, %172 : vector<16x16xi1>, vector<16x16xi32>
    %181 = vector.extract_strided_slice %6 {offsets = [9, 0], sizes = [1, 128], strides = [1, 1]} : vector<16x128xi32> to vector<1x128xi32>
    %182 = vector.broadcast %181 : vector<1x128xi32> to vector<16x128xi32>
    %183 = arith.minsi %176, %182 : vector<16x128xi32>
    %184 = arith.select %40, %183, %176 : vector<16x128xi1>, vector<16x128xi32>
    %185 = vector.extract_strided_slice %7 {offsets = [9, 0], sizes = [1, 16], strides = [1, 1]} : vector<16x16xi32> to vector<1x16xi32>
    %186 = vector.broadcast %185 : vector<1x16xi32> to vector<16x16xi32>
    %187 = arith.maxsi %180, %186 : vector<16x16xi32>
    %188 = arith.select %88, %187, %180 : vector<16x16xi1>, vector<16x16xi32>
    %189 = vector.extract_strided_slice %6 {offsets = [10, 0], sizes = [1, 128], strides = [1, 1]} : vector<16x128xi32> to vector<1x128xi32>
    %190 = vector.broadcast %189 : vector<1x128xi32> to vector<16x128xi32>
    %191 = arith.minsi %184, %190 : vector<16x128xi32>
    %192 = arith.select %43, %191, %184 : vector<16x128xi1>, vector<16x128xi32>
    %193 = vector.extract_strided_slice %7 {offsets = [10, 0], sizes = [1, 16], strides = [1, 1]} : vector<16x16xi32> to vector<1x16xi32>
    %194 = vector.broadcast %193 : vector<1x16xi32> to vector<16x16xi32>
    %195 = arith.maxsi %188, %194 : vector<16x16xi32>
    %196 = arith.select %91, %195, %188 : vector<16x16xi1>, vector<16x16xi32>
    %197 = vector.extract_strided_slice %6 {offsets = [11, 0], sizes = [1, 128], strides = [1, 1]} : vector<16x128xi32> to vector<1x128xi32>
    %198 = vector.broadcast %197 : vector<1x128xi32> to vector<16x128xi32>
    %199 = arith.minsi %192, %198 : vector<16x128xi32>
    %200 = arith.select %46, %199, %192 : vector<16x128xi1>, vector<16x128xi32>
    %201 = vector.extract_strided_slice %7 {offsets = [11, 0], sizes = [1, 16], strides = [1, 1]} : vector<16x16xi32> to vector<1x16xi32>
    %202 = vector.broadcast %201 : vector<1x16xi32> to vector<16x16xi32>
    %203 = arith.maxsi %196, %202 : vector<16x16xi32>
    %204 = arith.select %94, %203, %196 : vector<16x16xi1>, vector<16x16xi32>
    %205 = vector.extract_strided_slice %6 {offsets = [12, 0], sizes = [1, 128], strides = [1, 1]} : vector<16x128xi32> to vector<1x128xi32>
    %206 = vector.broadcast %205 : vector<1x128xi32> to vector<16x128xi32>
    %207 = arith.minsi %200, %206 : vector<16x128xi32>
    %208 = arith.select %49, %207, %200 : vector<16x128xi1>, vector<16x128xi32>
    %209 = vector.extract_strided_slice %7 {offsets = [12, 0], sizes = [1, 16], strides = [1, 1]} : vector<16x16xi32> to vector<1x16xi32>
    %210 = vector.broadcast %209 : vector<1x16xi32> to vector<16x16xi32>
    %211 = arith.maxsi %204, %210 : vector<16x16xi32>
    %212 = arith.select %97, %211, %204 : vector<16x16xi1>, vector<16x16xi32>
    %213 = vector.extract_strided_slice %6 {offsets = [13, 0], sizes = [1, 128], strides = [1, 1]} : vector<16x128xi32> to vector<1x128xi32>
    %214 = vector.broadcast %213 : vector<1x128xi32> to vector<16x128xi32>
    %215 = arith.minsi %208, %214 : vector<16x128xi32>
    %216 = arith.select %52, %215, %208 : vector<16x128xi1>, vector<16x128xi32>
    %217 = vector.extract_strided_slice %7 {offsets = [13, 0], sizes = [1, 16], strides = [1, 1]} : vector<16x16xi32> to vector<1x16xi32>
    %218 = vector.broadcast %217 : vector<1x16xi32> to vector<16x16xi32>
    %219 = arith.maxsi %212, %218 : vector<16x16xi32>
    %220 = arith.select %100, %219, %212 : vector<16x16xi1>, vector<16x16xi32>
    %221 = vector.extract_strided_slice %6 {offsets = [14, 0], sizes = [1, 128], strides = [1, 1]} : vector<16x128xi32> to vector<1x128xi32>
    %222 = vector.broadcast %221 : vector<1x128xi32> to vector<16x128xi32>
    %223 = arith.minsi %216, %222 : vector<16x128xi32>
    %224 = arith.select %55, %223, %216 : vector<16x128xi1>, vector<16x128xi32>
    %225 = vector.extract_strided_slice %7 {offsets = [14, 0], sizes = [1, 16], strides = [1, 1]} : vector<16x16xi32> to vector<1x16xi32>
    %226 = vector.broadcast %225 : vector<1x16xi32> to vector<16x16xi32>
    %227 = arith.maxsi %220, %226 : vector<16x16xi32>
    %228 = arith.select %103, %227, %220 : vector<16x16xi1>, vector<16x16xi32>
    %229 = vector.extract_strided_slice %6 {offsets = [15, 0], sizes = [1, 128], strides = [1, 1]} : vector<16x128xi32> to vector<1x128xi32>
    %230 = vector.broadcast %229 : vector<1x128xi32> to vector<16x128xi32>
    %231 = arith.minsi %224, %230 : vector<16x128xi32>
    %232 = arith.select %58, %231, %224 : vector<16x128xi1>, vector<16x128xi32>
    %233 = vector.extract_strided_slice %7 {offsets = [15, 0], sizes = [1, 16], strides = [1, 1]} : vector<16x16xi32> to vector<1x16xi32>
    %234 = vector.broadcast %233 : vector<1x16xi32> to vector<16x16xi32>
    %235 = arith.maxsi %228, %234 : vector<16x16xi32>
    %236 = arith.select %106, %235, %228 : vector<16x16xi1>, vector<16x16xi32>
    %c0_12 = arith.constant 0 : index
    %c0_13 = arith.constant 0 : index
    %c0_14 = arith.constant 0 : index
    %237 = vector.load %arg18[%c0_12, %c0_13, %c0_14] : memref<2x16x128xi32, #tpu.memory_space<vmem>>, vector<1x16x128xi32>
    %238 = vector.shape_cast %237 : vector<1x16x128xi32> to vector<16x128xi32>
    %239 = vector.shape_cast %232 : vector<16x128xi32> to vector<1x16x128xi32>
    tpu.vector_store %arg18[%c0_12, %c0_13, %c0_14], %239 {strides = array<i32>} : memref<2x16x128xi32, #tpu.memory_space<vmem>>, vector<1x16x128xi32>,
    %240 = arith.sitofp %236 : vector<16x16xi32> to vector<16x16xf32>
    %cst_15 = arith.constant 0.000000e+00 : f32
    %241 = vector.broadcast %cst_15 : f32 to vector<16x16xf32>
    %242 = arith.subf %241, %240 : vector<16x16xf32>
    %243 = math.exp2 %242 : vector<16x16xf32>
    %cst_16 = arith.constant dense<0.000000e+00> : vector<16xf32>
    %244 = vector.multi_reduction <add>, %243, %cst_16 [1] : vector<16x16xf32> to vector<16xf32>
    %245 = vector.shape_cast %244 : vector<16xf32> to vector<16x1xf32>
    %cst_17 = arith.constant 1.722880e+02 : f32
    %246 = vector.broadcast %cst_17 : f32 to vector<16x1xf32>
    %247 = arith.divf %246, %245 : vector<16x1xf32>
    %c0_18 = arith.constant 0 : index
    %c0_19 = arith.constant 0 : index
    %c0_20 = arith.constant 0 : index
    %248 = vector.load %arg7[%c0_18, %c0_19, %c0_20] : memref<2x32x32xf32, #tpu.memory_space<vmem>>, vector<1x32x32xf32>
    %249 = vector.shape_cast %248 : vector<1x32x32xf32> to vector<32x32xf32>
    %cst_21 = arith.constant dense<0.000000e+00> : vector<16x32xf32>
    %250 = tpu.matmul %5, %249, %cst_21 {dimension_numbers = #tpu.dot_dimension_numbers<[1], [0], [0], [1], [0, 0, 1, 1], [], []>} : vector<16x32xf32>, vector<32x32xf32>, vector<16x32xf32> -> vector<16x32xf32>
    %c0_22 = arith.constant 0 : index
    %c0_23 = arith.constant 0 : index
    %251 = vector.load %arg1[%c0_22, %c0_23] : memref<16x16xf32, #tpu.memory_space<vmem>>, vector<16x16xf32>
    %cst_24 = arith.constant dense<0.000000e+00> : vector<16x32xf32>
    %252 = tpu.matmul %251, %250, %cst_24 {dimension_numbers = #tpu.dot_dimension_numbers<[1], [0], [0], [1], [0, 0, 1, 1], [], []>} : vector<16x16xf32>, vector<16x32xf32>, vector<16x32xf32> -> vector<16x32xf32>
    %c0_25 = arith.constant 0 : index
    %c0_26 = arith.constant 0 : index
    %c0_27 = arith.constant 0 : index
    %253 = vector.load %arg8[%c0_25, %c0_26, %c0_27] : memref<2x1x32xf32, #tpu.memory_space<vmem>>, vector<1x1x32xf32>
    %254 = vector.shape_cast %253 : vector<1x1x32xf32> to vector<1x32xf32>
    %255 = vector.broadcast %254 : vector<1x32xf32> to vector<16x32xf32>
    %256 = arith.addf %252, %255 : vector<16x32xf32>
    %cst_28 = arith.constant 0.000000e+00 : f32
    %257 = vector.broadcast %cst_28 : f32 to vector<16x32xf32>
    %258 = arith.maximumf %256, %257 : vector<16x32xf32>
    %259 = arith.addf %5, %258 : vector<16x32xf32>
    %c2147483647_i32_29 = arith.constant 2147483647 : i32
    %260 = vector.broadcast %c2147483647_i32_29 : i32 to vector<16x128xi32>
    %c0_i32_30 = arith.constant 0 : i32
    %261 = vector.broadcast %c0_i32_30 : i32 to vector<16x16xi32>
    %262 = vector.extract_strided_slice %232 {offsets = [0, 0], sizes = [1, 128], strides = [1, 1]} : vector<16x128xi32> to vector<1x128xi32>
    %263 = vector.broadcast %262 : vector<1x128xi32> to vector<16x128xi32>
    %264 = arith.minsi %260, %263 : vector<16x128xi32>
    %265 = arith.select %13, %264, %260 : vector<16x128xi1>, vector<16x128xi32>
    %266 = vector.extract_strided_slice %236 {offsets = [0, 0], sizes = [1, 16], strides = [1, 1]} : vector<16x16xi32> to vector<1x16xi32>
    %267 = vector.broadcast %266 : vector<1x16xi32> to vector<16x16xi32>
    %268 = arith.maxsi %261, %267 : vector<16x16xi32>
    %269 = arith.select %61, %268, %261 : vector<16x16xi1>, vector<16x16xi32>
    %270 = vector.extract_strided_slice %232 {offsets = [1, 0], sizes = [1, 128], strides = [1, 1]} : vector<16x128xi32> to vector<1x128xi32>
    %271 = vector.broadcast %270 : vector<1x128xi32> to vector<16x128xi32>
    %272 = arith.minsi %265, %271 : vector<16x128xi32>
    %273 = arith.select %16, %272, %265 : vector<16x128xi1>, vector<16x128xi32>
    %274 = vector.extract_strided_slice %236 {offsets = [1, 0], sizes = [1, 16], strides = [1, 1]} : vector<16x16xi32> to vector<1x16xi32>
    %275 = vector.broadcast %274 : vector<1x16xi32> to vector<16x16xi32>
    %276 = arith.maxsi %269, %275 : vector<16x16xi32>
    %277 = arith.select %64, %276, %269 : vector<16x16xi1>, vector<16x16xi32>
    %278 = vector.extract_strided_slice %232 {offsets = [2, 0], sizes = [1, 128], strides = [1, 1]} : vector<16x128xi32> to vector<1x128xi32>
    %279 = vector.broadcast %278 : vector<1x128xi32> to vector<16x128xi32>
    %280 = arith.minsi %273, %279 : vector<16x128xi32>
    %281 = arith.select %19, %280, %273 : vector<16x128xi1>, vector<16x128xi32>
    %282 = vector.extract_strided_slice %236 {offsets = [2, 0], sizes = [1, 16], strides = [1, 1]} : vector<16x16xi32> to vector<1x16xi32>
    %283 = vector.broadcast %282 : vector<1x16xi32> to vector<16x16xi32>
    %284 = arith.maxsi %277, %283 : vector<16x16xi32>
    %285 = arith.select %67, %284, %277 : vector<16x16xi1>, vector<16x16xi32>
    %286 = vector.extract_strided_slice %232 {offsets = [3, 0], sizes = [1, 128], strides = [1, 1]} : vector<16x128xi32> to vector<1x128xi32>
    %287 = vector.broadcast %286 : vector<1x128xi32> to vector<16x128xi32>
    %288 = arith.minsi %281, %287 : vector<16x128xi32>
    %289 = arith.select %22, %288, %281 : vector<16x128xi1>, vector<16x128xi32>
    %290 = vector.extract_strided_slice %236 {offsets = [3, 0], sizes = [1, 16], strides = [1, 1]} : vector<16x16xi32> to vector<1x16xi32>
    %291 = vector.broadcast %290 : vector<1x16xi32> to vector<16x16xi32>
    %292 = arith.maxsi %285, %291 : vector<16x16xi32>
    %293 = arith.select %70, %292, %285 : vector<16x16xi1>, vector<16x16xi32>
    %294 = vector.extract_strided_slice %232 {offsets = [4, 0], sizes = [1, 128], strides = [1, 1]} : vector<16x128xi32> to vector<1x128xi32>
    %295 = vector.broadcast %294 : vector<1x128xi32> to vector<16x128xi32>
    %296 = arith.minsi %289, %295 : vector<16x128xi32>
    %297 = arith.select %25, %296, %289 : vector<16x128xi1>, vector<16x128xi32>
    %298 = vector.extract_strided_slice %236 {offsets = [4, 0], sizes = [1, 16], strides = [1, 1]} : vector<16x16xi32> to vector<1x16xi32>
    %299 = vector.broadcast %298 : vector<1x16xi32> to vector<16x16xi32>
    %300 = arith.maxsi %293, %299 : vector<16x16xi32>
    %301 = arith.select %73, %300, %293 : vector<16x16xi1>, vector<16x16xi32>
    %302 = vector.extract_strided_slice %232 {offsets = [5, 0], sizes = [1, 128], strides = [1, 1]} : vector<16x128xi32> to vector<1x128xi32>
    %303 = vector.broadcast %302 : vector<1x128xi32> to vector<16x128xi32>
    %304 = arith.minsi %297, %303 : vector<16x128xi32>
    %305 = arith.select %28, %304, %297 : vector<16x128xi1>, vector<16x128xi32>
    %306 = vector.extract_strided_slice %236 {offsets = [5, 0], sizes = [1, 16], strides = [1, 1]} : vector<16x16xi32> to vector<1x16xi32>
    %307 = vector.broadcast %306 : vector<1x16xi32> to vector<16x16xi32>
    %308 = arith.maxsi %301, %307 : vector<16x16xi32>
    %309 = arith.select %76, %308, %301 : vector<16x16xi1>, vector<16x16xi32>
    %310 = vector.extract_strided_slice %232 {offsets = [6, 0], sizes = [1, 128], strides = [1, 1]} : vector<16x128xi32> to vector<1x128xi32>
    %311 = vector.broadcast %310 : vector<1x128xi32> to vector<16x128xi32>
    %312 = arith.minsi %305, %311 : vector<16x128xi32>
    %313 = arith.select %31, %312, %305 : vector<16x128xi1>, vector<16x128xi32>
    %314 = vector.extract_strided_slice %236 {offsets = [6, 0], sizes = [1, 16], strides = [1, 1]} : vector<16x16xi32> to vector<1x16xi32>
    %315 = vector.broadcast %314 : vector<1x16xi32> to vector<16x16xi32>
    %316 = arith.maxsi %309, %315 : vector<16x16xi32>
    %317 = arith.select %79, %316, %309 : vector<16x16xi1>, vector<16x16xi32>
    %318 = vector.extract_strided_slice %232 {offsets = [7, 0], sizes = [1, 128], strides = [1, 1]} : vector<16x128xi32> to vector<1x128xi32>
    %319 = vector.broadcast %318 : vector<1x128xi32> to vector<16x128xi32>
    %320 = arith.minsi %313, %319 : vector<16x128xi32>
    %321 = arith.select %34, %320, %313 : vector<16x128xi1>, vector<16x128xi32>
    %322 = vector.extract_strided_slice %236 {offsets = [7, 0], sizes = [1, 16], strides = [1, 1]} : vector<16x16xi32> to vector<1x16xi32>
    %323 = vector.broadcast %322 : vector<1x16xi32> to vector<16x16xi32>
    %324 = arith.maxsi %317, %323 : vector<16x16xi32>
    %325 = arith.select %82, %324, %317 : vector<16x16xi1>, vector<16x16xi32>
    %326 = vector.extract_strided_slice %232 {offsets = [8, 0], sizes = [1, 128], strides = [1, 1]} : vector<16x128xi32> to vector<1x128xi32>
    %327 = vector.broadcast %326 : vector<1x128xi32> to vector<16x128xi32>
    %328 = arith.minsi %321, %327 : vector<16x128xi32>
    %329 = arith.select %37, %328, %321 : vector<16x128xi1>, vector<16x128xi32>
    %330 = vector.extract_strided_slice %236 {offsets = [8, 0], sizes = [1, 16], strides = [1, 1]} : vector<16x16xi32> to vector<1x16xi32>
    %331 = vector.broadcast %330 : vector<1x16xi32> to vector<16x16xi32>
    %332 = arith.maxsi %325, %331 : vector<16x16xi32>
    %333 = arith.select %85, %332, %325 : vector<16x16xi1>, vector<16x16xi32>
    %334 = vector.extract_strided_slice %232 {offsets = [9, 0], sizes = [1, 128], strides = [1, 1]} : vector<16x128xi32> to vector<1x128xi32>
    %335 = vector.broadcast %334 : vector<1x128xi32> to vector<16x128xi32>
    %336 = arith.minsi %329, %335 : vector<16x128xi32>
    %337 = arith.select %40, %336, %329 : vector<16x128xi1>, vector<16x128xi32>
    %338 = vector.extract_strided_slice %236 {offsets = [9, 0], sizes = [1, 16], strides = [1, 1]} : vector<16x16xi32> to vector<1x16xi32>
    %339 = vector.broadcast %338 : vector<1x16xi32> to vector<16x16xi32>
    %340 = arith.maxsi %333, %339 : vector<16x16xi32>
    %341 = arith.select %88, %340, %333 : vector<16x16xi1>, vector<16x16xi32>
    %342 = vector.extract_strided_slice %232 {offsets = [10, 0], sizes = [1, 128], strides = [1, 1]} : vector<16x128xi32> to vector<1x128xi32>
    %343 = vector.broadcast %342 : vector<1x128xi32> to vector<16x128xi32>
    %344 = arith.minsi %337, %343 : vector<16x128xi32>
    %345 = arith.select %43, %344, %337 : vector<16x128xi1>, vector<16x128xi32>
    %346 = vector.extract_strided_slice %236 {offsets = [10, 0], sizes = [1, 16], strides = [1, 1]} : vector<16x16xi32> to vector<1x16xi32>
    %347 = vector.broadcast %346 : vector<1x16xi32> to vector<16x16xi32>
    %348 = arith.maxsi %341, %347 : vector<16x16xi32>
    %349 = arith.select %91, %348, %341 : vector<16x16xi1>, vector<16x16xi32>
    %350 = vector.extract_strided_slice %232 {offsets = [11, 0], sizes = [1, 128], strides = [1, 1]} : vector<16x128xi32> to vector<1x128xi32>
    %351 = vector.broadcast %350 : vector<1x128xi32> to vector<16x128xi32>
    %352 = arith.minsi %345, %351 : vector<16x128xi32>
    %353 = arith.select %46, %352, %345 : vector<16x128xi1>, vector<16x128xi32>
    %354 = vector.extract_strided_slice %236 {offsets = [11, 0], sizes = [1, 16], strides = [1, 1]} : vector<16x16xi32> to vector<1x16xi32>
    %355 = vector.broadcast %354 : vector<1x16xi32> to vector<16x16xi32>
    %356 = arith.maxsi %349, %355 : vector<16x16xi32>
    %357 = arith.select %94, %356, %349 : vector<16x16xi1>, vector<16x16xi32>
    %358 = vector.extract_strided_slice %232 {offsets = [12, 0], sizes = [1, 128], strides = [1, 1]} : vector<16x128xi32> to vector<1x128xi32>
    %359 = vector.broadcast %358 : vector<1x128xi32> to vector<16x128xi32>
    %360 = arith.minsi %353, %359 : vector<16x128xi32>
    %361 = arith.select %49, %360, %353 : vector<16x128xi1>, vector<16x128xi32>
    %362 = vector.extract_strided_slice %236 {offsets = [12, 0], sizes = [1, 16], strides = [1, 1]} : vector<16x16xi32> to vector<1x16xi32>
    %363 = vector.broadcast %362 : vector<1x16xi32> to vector<16x16xi32>
    %364 = arith.maxsi %357, %363 : vector<16x16xi32>
    %365 = arith.select %97, %364, %357 : vector<16x16xi1>, vector<16x16xi32>
    %366 = vector.extract_strided_slice %232 {offsets = [13, 0], sizes = [1, 128], strides = [1, 1]} : vector<16x128xi32> to vector<1x128xi32>
    %367 = vector.broadcast %366 : vector<1x128xi32> to vector<16x128xi32>
    %368 = arith.minsi %361, %367 : vector<16x128xi32>
    %369 = arith.select %52, %368, %361 : vector<16x128xi1>, vector<16x128xi32>
    %370 = vector.extract_strided_slice %236 {offsets = [13, 0], sizes = [1, 16], strides = [1, 1]} : vector<16x16xi32> to vector<1x16xi32>
    %371 = vector.broadcast %370 : vector<1x16xi32> to vector<16x16xi32>
    %372 = arith.maxsi %365, %371 : vector<16x16xi32>
    %373 = arith.select %100, %372, %365 : vector<16x16xi1>, vector<16x16xi32>
    %374 = vector.extract_strided_slice %232 {offsets = [14, 0], sizes = [1, 128], strides = [1, 1]} : vector<16x128xi32> to vector<1x128xi32>
    %375 = vector.broadcast %374 : vector<1x128xi32> to vector<16x128xi32>
    %376 = arith.minsi %369, %375 : vector<16x128xi32>
    %377 = arith.select %55, %376, %369 : vector<16x128xi1>, vector<16x128xi32>
    %378 = vector.extract_strided_slice %236 {offsets = [14, 0], sizes = [1, 16], strides = [1, 1]} : vector<16x16xi32> to vector<1x16xi32>
    %379 = vector.broadcast %378 : vector<1x16xi32> to vector<16x16xi32>
    %380 = arith.maxsi %373, %379 : vector<16x16xi32>
    %381 = arith.select %103, %380, %373 : vector<16x16xi1>, vector<16x16xi32>
    %382 = vector.extract_strided_slice %232 {offsets = [15, 0], sizes = [1, 128], strides = [1, 1]} : vector<16x128xi32> to vector<1x128xi32>
    %383 = vector.broadcast %382 : vector<1x128xi32> to vector<16x128xi32>
    %384 = arith.minsi %377, %383 : vector<16x128xi32>
    %385 = arith.select %58, %384, %377 : vector<16x128xi1>, vector<16x128xi32>
    %386 = vector.extract_strided_slice %236 {offsets = [15, 0], sizes = [1, 16], strides = [1, 1]} : vector<16x16xi32> to vector<1x16xi32>
    %387 = vector.broadcast %386 : vector<1x16xi32> to vector<16x16xi32>
    %388 = arith.maxsi %381, %387 : vector<16x16xi32>
    %389 = arith.select %106, %388, %381 : vector<16x16xi1>, vector<16x16xi32>
    %c1 = arith.constant 1 : index
    %c0_31 = arith.constant 0 : index
    %c0_32 = arith.constant 0 : index
    %390 = vector.load %arg18[%c1, %c0_31, %c0_32] : memref<2x16x128xi32, #tpu.memory_space<vmem>>, vector<1x16x128xi32>
    %391 = vector.shape_cast %390 : vector<1x16x128xi32> to vector<16x128xi32>
    %392 = vector.shape_cast %385 : vector<16x128xi32> to vector<1x16x128xi32>
    tpu.vector_store %arg18[%c1, %c0_31, %c0_32], %392 {strides = array<i32>} : memref<2x16x128xi32, #tpu.memory_space<vmem>>, vector<1x16x128xi32>,
    %393 = arith.sitofp %389 : vector<16x16xi32> to vector<16x16xf32>
    %cst_33 = arith.constant 0.000000e+00 : f32
    %394 = vector.broadcast %cst_33 : f32 to vector<16x16xf32>
    %395 = arith.subf %394, %393 : vector<16x16xf32>
    %396 = math.exp2 %395 : vector<16x16xf32>
    %cst_34 = arith.constant dense<0.000000e+00> : vector<16xf32>
    %397 = vector.multi_reduction <add>, %396, %cst_34 [1] : vector<16x16xf32> to vector<16xf32>
    %398 = vector.shape_cast %397 : vector<16xf32> to vector<16x1xf32>
    %cst_35 = arith.constant 1.722880e+02 : f32
    %399 = vector.broadcast %cst_35 : f32 to vector<16x1xf32>
    %400 = arith.divf %399, %398 : vector<16x1xf32>
    %c1_36 = arith.constant 1 : index
    %c0_37 = arith.constant 0 : index
    %c0_38 = arith.constant 0 : index
    %401 = vector.load %arg7[%c1_36, %c0_37, %c0_38] : memref<2x32x32xf32, #tpu.memory_space<vmem>>, vector<1x32x32xf32>
    %402 = vector.shape_cast %401 : vector<1x32x32xf32> to vector<32x32xf32>
    %cst_39 = arith.constant dense<0.000000e+00> : vector<16x32xf32>
    %403 = tpu.matmul %259, %402, %cst_39 {dimension_numbers = #tpu.dot_dimension_numbers<[1], [0], [0], [1], [0, 0, 1, 1], [], []>} : vector<16x32xf32>, vector<32x32xf32>, vector<16x32xf32> -> vector<16x32xf32>
    %c0_40 = arith.constant 0 : index
    %c0_41 = arith.constant 0 : index
    %404 = vector.load %arg1[%c0_40, %c0_41] : memref<16x16xf32, #tpu.memory_space<vmem>>, vector<16x16xf32>
    %cst_42 = arith.constant dense<0.000000e+00> : vector<16x32xf32>
    %405 = tpu.matmul %404, %403, %cst_42 {dimension_numbers = #tpu.dot_dimension_numbers<[1], [0], [0], [1], [0, 0, 1, 1], [], []>} : vector<16x16xf32>, vector<16x32xf32>, vector<16x32xf32> -> vector<16x32xf32>
    %c1_43 = arith.constant 1 : index
    %c0_44 = arith.constant 0 : index
    %c0_45 = arith.constant 0 : index
    %406 = vector.load %arg8[%c1_43, %c0_44, %c0_45] : memref<2x1x32xf32, #tpu.memory_space<vmem>>, vector<1x1x32xf32>
    %407 = vector.shape_cast %406 : vector<1x1x32xf32> to vector<1x32xf32>
    %408 = vector.broadcast %407 : vector<1x32xf32> to vector<16x32xf32>
    %409 = arith.addf %405, %408 : vector<16x32xf32>
    %cst_46 = arith.constant 0.000000e+00 : f32
    %410 = vector.broadcast %cst_46 : f32 to vector<16x32xf32>
    %411 = arith.maximumf %409, %410 : vector<16x32xf32>
    %412 = arith.addf %259, %411 : vector<16x32xf32>
    %cst_47 = arith.constant 0.000000e+00 : f32
    %413 = vector.broadcast %cst_47 : f32 to vector<16x96xf32>
    %414 = tpu.concatenate %412, %413 in 1 : vector<16x32xf32>, vector<16x96xf32> -> vector<16x128xf32>
    %c0_48 = arith.constant 0 : index
    %c0_49 = arith.constant 0 : index
    %415 = vector.load %arg17[%c0_48, %c0_49] : memref<16x128xf32, #tpu.memory_space<vmem>>, vector<16x128xf32>
    tpu.vector_store %arg17[%c0_48, %c0_49], %414 {strides = array<i32>} : memref<16x128xf32, #tpu.memory_space<vmem>>, vector<16x128xf32>,
    %416 = tpu.concatenate %236, %389 in 1 : vector<16x16xi32>, vector<16x16xi32> -> vector<16x32xi32>
    %c0_i32_50 = arith.constant 0 : i32
    %417 = vector.broadcast %c0_i32_50 : i32 to vector<16x96xi32>
    %418 = tpu.concatenate %416, %417 in 1 : vector<16x32xi32>, vector<16x96xi32> -> vector<16x128xi32>
    %c0_51 = arith.constant 0 : index
    %c0_52 = arith.constant 0 : index
    %419 = vector.load %arg19[%c0_51, %c0_52] : memref<16x128xi32, #tpu.memory_space<vmem>>, vector<16x128xi32>
    tpu.vector_store %arg19[%c0_51, %c0_52], %418 {strides = array<i32>} : memref<16x128xi32, #tpu.memory_space<vmem>>, vector<16x128xi32>,
    %420 = tpu.concatenate %247, %400 in 1 : vector<16x1xf32>, vector<16x1xf32> -> vector<16x2xf32>
    %cst_53 = arith.constant 0.000000e+00 : f32
    %421 = vector.broadcast %cst_53 : f32 to vector<16x126xf32>
    %422 = tpu.concatenate %420, %421 in 1 : vector<16x2xf32>, vector<16x126xf32> -> vector<16x128xf32>
    %c0_54 = arith.constant 0 : index
    %c0_55 = arith.constant 0 : index
    %423 = vector.load %arg20[%c0_54, %c0_55] : memref<16x128xf32, #tpu.memory_space<vmem>>, vector<16x128xf32>
    tpu.vector_store %arg20[%c0_54, %c0_55], %422 {strides = array<i32>} : memref<16x128xf32, #tpu.memory_space<vmem>>, vector<16x128xf32>,
    %c0_56 = arith.constant 0 : index
    %c0_57 = arith.constant 0 : index
    %424 = vector.load %arg9[%c0_56, %c0_57] : memref<8x8xf32, #tpu.memory_space<vmem>>, vector<8x8xf32>
    %c0_58 = arith.constant 0 : index
    %c0_59 = arith.constant 0 : index
    %425 = vector.load %arg11[%c0_58, %c0_59] : memref<8x8xf32, #tpu.memory_space<vmem>>, vector<8x8xf32>
    %cst_60 = arith.constant dense<0.000000e+00> : vector<8x8xf32>
    %426 = tpu.matmul %424, %425, %cst_60 {dimension_numbers = #tpu.dot_dimension_numbers<[1], [0], [0], [1], [0, 0, 1, 1], [], []>} : vector<8x8xf32>, vector<8x8xf32>, vector<8x8xf32> -> vector<8x8xf32>
    %c0_61 = arith.constant 0 : index
    %c0_62 = arith.constant 0 : index
    %427 = vector.load %arg12[%c0_61, %c0_62] : memref<1x8xf32, #tpu.memory_space<vmem>>, vector<1x8xf32>
    %428 = vector.broadcast %427 : vector<1x8xf32> to vector<8x8xf32>
    %429 = arith.addf %426, %428 : vector<8x8xf32>
    %cst_63 = arith.constant 0.000000e+00 : f32
    %430 = vector.broadcast %cst_63 : f32 to vector<8x8xf32>
    %431 = arith.maximumf %429, %430 : vector<8x8xf32>
    %c0_64 = arith.constant 0 : index
    %c0_65 = arith.constant 0 : index
    %432 = vector.load %arg10[%c0_64, %c0_65] : memref<16x16xf32, #tpu.memory_space<vmem>>, vector<16x16xf32>
    %cst_66 = arith.constant dense<0.000000e+00> : vector<16x32xf32>
    %433 = tpu.matmul %432, %412, %cst_66 {dimension_numbers = #tpu.dot_dimension_numbers<[1], [0], [0], [1], [0, 0, 1, 1], [], []>} : vector<16x16xf32>, vector<16x32xf32>, vector<16x32xf32> -> vector<16x32xf32>
    %434 = vector.extract_strided_slice %433 {offsets = [0, 0], sizes = [8, 32], strides = [1, 1]} : vector<16x32xf32> to vector<8x32xf32>
    %435 = vector.extract_strided_slice %433 {offsets = [8, 0], sizes = [8, 32], strides = [1, 1]} : vector<16x32xf32> to vector<8x32xf32>
    %436 = arith.mulf %434, %435 : vector<8x32xf32>
    %c0_67 = arith.constant 0 : index
    %c0_68 = arith.constant 0 : index
    %437 = vector.load %arg13[%c0_67, %c0_68] : memref<32x32xf32, #tpu.memory_space<vmem>>, vector<32x32xf32>
    %cst_69 = arith.constant dense<0.000000e+00> : vector<8x32xf32>
    %438 = tpu.matmul %436, %437, %cst_69 {dimension_numbers = #tpu.dot_dimension_numbers<[1], [0], [0], [1], [0, 0, 1, 1], [], []>} : vector<8x32xf32>, vector<32x32xf32>, vector<8x32xf32> -> vector<8x32xf32>
    %c0_70 = arith.constant 0 : index
    %c0_71 = arith.constant 0 : index
    %439 = vector.load %arg14[%c0_70, %c0_71] : memref<1x32xf32, #tpu.memory_space<vmem>>, vector<1x32xf32>
    %440 = vector.broadcast %439 : vector<1x32xf32> to vector<8x32xf32>
    %441 = arith.addf %438, %440 : vector<8x32xf32>
    %cst_72 = arith.constant 0.000000e+00 : f32
    %442 = vector.broadcast %cst_72 : f32 to vector<8x32xf32>
    %443 = arith.maximumf %441, %442 : vector<8x32xf32>
    %c0_73 = arith.constant 0 : index
    %c0_74 = arith.constant 0 : index
    %444 = vector.load %arg15[%c0_73, %c0_74] : memref<40x128xf32, #tpu.memory_space<vmem>>, vector<8x128xf32>
    %cst_75 = arith.constant dense<0.000000e+00> : vector<8x128xf32>
    %445 = tpu.matmul %431, %444, %cst_75 {dimension_numbers = #tpu.dot_dimension_numbers<[1], [0], [0], [1], [0, 0, 1, 1], [], []>} : vector<8x8xf32>, vector<8x128xf32>, vector<8x128xf32> -> vector<8x128xf32>
    %c8 = arith.constant 8 : index
    %c0_76 = arith.constant 0 : index
    %446 = vector.load %arg15[%c8, %c0_76] : memref<40x128xf32, #tpu.memory_space<vmem>>, vector<32x128xf32>
    %cst_77 = arith.constant dense<0.000000e+00> : vector<8x128xf32>
    %447 = tpu.matmul %443, %446, %cst_77 {dimension_numbers = #tpu.dot_dimension_numbers<[1], [0], [0], [1], [0, 0, 1, 1], [], []>} : vector<8x32xf32>, vector<32x128xf32>, vector<8x128xf32> -> vector<8x128xf32>
    %448 = arith.addf %445, %447 : vector<8x128xf32>
    %c0_78 = arith.constant 0 : index
    %c0_79 = arith.constant 0 : index
    %449 = vector.load %arg16[%c0_78, %c0_79] : memref<1x128xf32, #tpu.memory_space<vmem>>, vector<1x128xf32>
    %450 = vector.broadcast %449 : vector<1x128xf32> to vector<8x128xf32>
    %451 = arith.addf %448, %450 : vector<8x128xf32>
    %452 = arith.negf %451 : vector<8x128xf32>
    %453 = math.exp %452 : vector<8x128xf32>
    %cst_80 = arith.constant 1.000000e+00 : f32
    %454 = vector.broadcast %cst_80 : f32 to vector<8x128xf32>
    %455 = arith.addf %454, %453 : vector<8x128xf32>
    %456 = arith.divf %454, %455 : vector<8x128xf32>
    %c0_81 = arith.constant 0 : index
    %c0_82 = arith.constant 0 : index
    %457 = vector.load %arg21[%c0_81, %c0_82] : memref<8x128xf32, #tpu.memory_space<vmem>>, vector<8x128xf32>
    tpu.vector_store %arg21[%c0_81, %c0_82], %456 {strides = array<i32>} : memref<8x128xf32, #tpu.memory_space<vmem>>, vector<8x128xf32>,
    return
  }
}

</mosaic_0001>

<llo_original>
// kernel: tpu_custom_call.1
$region0: #{tpu_custom_call.1}
  #allocation0 [shape = 'u32[]', space=smem, size = 0x4, offset = 0x4, fixed_abs, tag = 'smem constant byte address 0x4 - core index']
  #allocation1 [shape = 'u32[144,128]{1,0:T(1,128)}', space=vmem, size = 0x12000, scoped, tag = 'internal scratch']
  %s0 = inlined_call_operand.hbm [shape: f32[16,32], index: 0, kind: input, shape index: {}]
  %s1 = inlined_call_operand.hbm [shape: f32[16,16], index: 1, kind: input, shape index: {}]
  %s2 = inlined_call_operand.hbm [shape: f32[16,16], index: 2, kind: input, shape index: {}]
  %s3 = inlined_call_operand.hbm [shape: s32[16,128], index: 3, kind: input, shape index: {}]
  %s4 = inlined_call_operand.hbm [shape: s32[16,16], index: 4, kind: input, shape index: {}]
  %s5 = inlined_call_operand.hbm [shape: f32[32,32], index: 5, kind: input, shape index: {}]
  %s6 = inlined_call_operand.hbm [shape: f32[1,32], index: 6, kind: input, shape index: {}]
  %s7 = inlined_call_operand.hbm [shape: f32[2,32,32], index: 7, kind: input, shape index: {}]
  %s8 = inlined_call_operand.vmem [shape: f32[2,1,32], index: 8, kind: input, shape index: {}]
  %s9 = inlined_call_operand.hbm [shape: f32[8,8], index: 9, kind: input, shape index: {}]
  %s10 = inlined_call_operand.vmem [shape: f32[16,16], index: 10, kind: input, shape index: {}]
  %s11 = inlined_call_operand.hbm [shape: f32[8,8], index: 11, kind: input, shape index: {}]
  %s12 = inlined_call_operand.vmem [shape: f32[1,8], index: 12, kind: input, shape index: {}]
  %s13 = inlined_call_operand.hbm [shape: f32[32,32], index: 13, kind: input, shape index: {}]
  %s14 = inlined_call_operand.vmem [shape: f32[1,32], index: 14, kind: input, shape index: {}]
  %s15 = inlined_call_operand.hbm [shape: f32[40,128], index: 15, kind: input, shape index: {}]
  %s16 = inlined_call_operand.vmem [shape: f32[1,128], index: 16, kind: input, shape index: {}]
  %s17 = inlined_call_operand.hbm [shape: f32[16,128], index: 17, kind: output, shape index: {0}]
  %s18 = inlined_call_operand.hbm [shape: s32[2,16,128], index: 18, kind: output, shape index: {1}]
  %s19 = inlined_call_operand.hbm [shape: s32[16,128], index: 19, kind: output, shape index: {2}]
  %s20 = inlined_call_operand.hbm [shape: f32[16,128], index: 20, kind: output, shape index: {3}]
  %s21 = inlined_call_operand.hbm [shape: f32[8,128], index: 21, kind: output, shape index: {4}]
  %22 = xla_tuple %s17, %s18, %s19, %s20, %s21
  %s23 = sld [smem:[#allocation0]]
  $region158: #{tpu_custom_call.1} parent=0
    _
  %s25 = ssub.s32 1, %s23
  %s26 = scalar_select 0, %s25, %s23
  $region1: #{tpu_custom_call.1} parent=0
    #allocation2 [shape = 'u8[8192]{0}', space=vmem, size = 0x2000, scoped, tag = 'input window, operand 0, single buffered']
    #allocation3 [shape = 's32[1]{0}', space=sflag, size = 0x4, scoped, tag = 'scoped memory for tpu_custom_call.1']
    #allocation4 [shape = 's32[1]{0}', space=sflag, size = 0x4, scoped, tag = 'scoped memory for tpu_custom_call.1']
    #allocation5 [shape = 'u8[8192]{0}', space=vmem, size = 0x2000, scoped, tag = 'input window, operand 1, single buffered']
    #allocation6 [shape = 's32[1]{0}', space=sflag, size = 0x4, scoped, tag = 'scoped memory for tpu_custom_call.1']
    #allocation7 [shape = 'u8[8192]{0}', space=vmem, size = 0x2000, scoped, tag = 'input window, operand 2, single buffered']
    #allocation8 [shape = 'u8[8192]{0}', space=vmem, size = 0x2000, scoped, tag = 'input window, operand 3, single buffered']
    #allocation9 [shape = 's32[1]{0}', space=sflag, size = 0x4, scoped, tag = 'scoped memory for tpu_custom_call.1']
    #allocation10 [shape = 'u8[8192]{0}', space=vmem, size = 0x2000, scoped, tag = 'input window, operand 4, single buffered']
    #allocation11 [shape = 'u8[16384]{0}', space=vmem, size = 0x4000, scoped, tag = 'input window, operand 5, single buffered']
    #allocation12 [shape = 's32[1]{0}', space=sflag, size = 0x4, scoped, tag = 'scoped memory for tpu_custom_call.1']
    #allocation13 [shape = 'u8[512]{0}', space=vmem, size = 0x400, scoped, tag = 'input window, operand 6, single buffered']
    #allocation14 [shape = 'u8[32768]{0}', space=vmem, size = 0x8000, scoped, tag = 'input window, operand 7, single buffered']
    #allocation15 [shape = 's32[1]{0}', space=sflag, size = 0x4, scoped, tag = 'scoped memory for tpu_custom_call.1']
    #allocation16 [shape = 'u8[4096]{0}', space=vmem, size = 0x1000, scoped, tag = 'input window, operand 9, single buffered']
    #allocation17 [shape = 'u8[4096]{0}', space=vmem, size = 0x1000, scoped, tag = 'input window, operand 11, single buffered']
    #allocation18 [shape = 's32[1]{0}', space=sflag, size = 0x4, scoped, tag = 'scoped memory for tpu_custom_call.1']
    #allocation19 [shape = 'u8[16384]{0}', space=vmem, size = 0x4000, scoped, tag = 'input window, operand 13, single buffered']
    #allocation20 [shape = 'u8[20480]{0}', space=vmem, size = 0x5000, scoped, tag = 'input window, operand 15, single buffered']
    #allocation21 [shape = 's32[1]{0}', space=sflag, size = 0x4, scoped, tag = 'scoped memory for tpu_custom_call.1']
    #allocation22 [shape = 'u8[8192]{0}', space=vmem, size = 0x2000, scoped, tag = 'output window, operand 0, single buffered']
    #allocation23 [shape = 'u8[16384]{0}', space=vmem, size = 0x4000, scoped, tag = 'output window, operand 1, single buffered']
    #allocation24 [shape = 's32[1]{0}', space=sflag, size = 0x4, scoped, tag = 'scoped memory for tpu_custom_call.1']
    #allocation25 [shape = 'u8[8192]{0}', space=vmem, size = 0x2000, scoped, tag = 'output window, operand 2, single buffered']
    #allocation26 [shape = 'u8[8192]{0}', space=vmem, size = 0x2000, scoped, tag = 'output window, operand 3, single buffered']
    #allocation27 [shape = 's32[1]{0}', space=sflag, size = 0x4, scoped, tag = 'scoped memory for tpu_custom_call.1']
    #allocation28 [shape = 'u8[4096]{0}', space=vmem, size = 0x1000, scoped, tag = 'output window, operand 4, single buffered']
    %27 = vsyncpa [#allocation3], 0
    %28 = vsyncpa [#allocation6], 0
    %29 = vsyncpa [#allocation9], 0
    %30 = vsyncpa [#allocation12], 0
    %31 = vsyncpa [#allocation15], 0
    %32 = vsyncpa [#allocation18], 0
    %33 = vsyncpa [#allocation21], 0
    %34 = vsyncpa [#allocation4], 0
    %35 = vsyncpa [#allocation24], 0
    %36 = vsyncpa [#allocation27], 0
    // Predicated region
    $region2: #{tpu_custom_call.1} parent=1 // pred_check
      _
    $region3: #{tpu_custom_call.1} parent=1 // pred_check_branch
      %38 = sbr.rel (0) target = $region5
    $region4: #{tpu_custom_call.1} parent=1 // pred_region
      %s40 = ssub.s32 256, 256
      %41 = vsyncadd [#allocation3], %s40
      %s42 = sshll.u32 [#allocation2], 4
      %s43 = int_to_ptr.vmem [resolvable:$true] %s42
      %48 = dma.hbm_to_vmem [thread:$0]  %s0, 256, %s43, [#allocation3], 128, 128, 8
    $region5: #{tpu_custom_call.1} parent=1 // pred_fallthru
      _
    // Predicated region
    $region6: #{tpu_custom_call.1} parent=1 // pred_check
      _
    $region7: #{tpu_custom_call.1} parent=1 // pred_check_branch
      %50 = sbr.rel (0) target = $region9
    $region8: #{tpu_custom_call.1} parent=1 // pred_region
      %s52 = ssub.s32 256, 256
      %53 = vsyncadd [#allocation6], %s52
      %s54 = sshll.u32 [#allocation5], 4
      %s55 = int_to_ptr.vmem [resolvable:$true] %s54
      %60 = dma.hbm_to_vmem [thread:$0]  %s1, 256, %s55, [#allocation6], 128, 128, 8
    $region9: #{tpu_custom_call.1} parent=1 // pred_fallthru
      _
    // Predicated region
    $region10: #{tpu_custom_call.1} parent=1 // pred_check
      _
    $region11: #{tpu_custom_call.1} parent=1 // pred_check_branch
      %62 = sbr.rel (0) target = $region13
    $region12: #{tpu_custom_call.1} parent=1 // pred_region
      %s64 = ssub.s32 256, 256
      %65 = vsyncadd [#allocation6], %s64
      %s66 = sshll.u32 [#allocation7], 4
      %s67 = int_to_ptr.vmem [resolvable:$true] %s66
      %72 = dma.hbm_to_vmem [thread:$0]  %s2, 256, %s67, [#allocation6], 128, 128, 8
    $region13: #{tpu_custom_call.1} parent=1 // pred_fallthru
      _
    // Predicated region
    $region14: #{tpu_custom_call.1} parent=1 // pred_check
      _
    $region15: #{tpu_custom_call.1} parent=1 // pred_check_branch
      %74 = sbr.rel (0) target = $region17
    $region16: #{tpu_custom_call.1} parent=1 // pred_region
      %s76 = ssub.s32 256, 256
      %77 = vsyncadd [#allocation9], %s76
      %s78 = sshll.u32 [#allocation8], 4
      %s79 = int_to_ptr.vmem [resolvable:$true] %s78
      %84 = dma.hbm_to_vmem [thread:$0]  %s3, 256, %s79, [#allocation9], 128, 128, 8
    $region17: #{tpu_custom_call.1} parent=1 // pred_fallthru
      _
    // Predicated region
    $region18: #{tpu_custom_call.1} parent=1 // pred_check
      _
    $region19: #{tpu_custom_call.1} parent=1 // pred_check_branch
      %86 = sbr.rel (0) target = $region21
    $region20: #{tpu_custom_call.1} parent=1 // pred_region
      %s88 = ssub.s32 256, 256
      %89 = vsyncadd [#allocation9], %s88
      %s90 = sshll.u32 [#allocation10], 4
      %s91 = int_to_ptr.vmem [resolvable:$true] %s90
      %96 = dma.hbm_to_vmem [thread:$0]  %s4, 256, %s91, [#allocation9], 128, 128, 8
    $region21: #{tpu_custom_call.1} parent=1 // pred_fallthru
      _
    // Predicated region
    $region22: #{tpu_custom_call.1} parent=1 // pred_check
      _
    $region23: #{tpu_custom_call.1} parent=1 // pred_check_branch
      %98 = sbr.rel (0) target = $region25
    $region24: #{tpu_custom_call.1} parent=1 // pred_region
      %s100 = ssub.s32 512, 512
      %101 = vsyncadd [#allocation12], %s100
      %s102 = sshll.u32 [#allocation11], 4
      %s103 = int_to_ptr.vmem [resolvable:$true] %s102
      %108 = dma.hbm_to_vmem [thread:$0]  %s5, 512, %s103, [#allocation12], 128, 128, 8
    $region25: #{tpu_custom_call.1} parent=1 // pred_fallthru
      _
    // Predicated region
    $region26: #{tpu_custom_call.1} parent=1 // pred_check
      _
    $region27: #{tpu_custom_call.1} parent=1 // pred_check_branch
      %110 = sbr.rel (0) target = $region29
    $region28: #{tpu_custom_call.1} parent=1 // pred_region
      %s112 = ssub.s32 16, 16
      %113 = vsyncadd [#allocation12], %s112
      %s115 = sshll.u32 [#allocation13], 4
      %s116 = int_to_ptr.vmem [resolvable:$true] %s115
      %118 = dma.hbm_to_vmem [thread:$0]  %s6, 16, %s116, [#allocation12]
    $region29: #{tpu_custom_call.1} parent=1 // pred_fallthru
      _
    // Predicated region
    $region30: #{tpu_custom_call.1} parent=1 // pred_check
      _
    $region31: #{tpu_custom_call.1} parent=1 // pred_check_branch
      %120 = sbr.rel (0) target = $region33
    $region32: #{tpu_custom_call.1} parent=1 // pred_region
      %s122 = ssub.s32 1024, 1024
      %123 = vsyncadd [#allocation15], %s122
      %s124 = sshll.u32 [#allocation14], 4
      %s125 = int_to_ptr.vmem [resolvable:$true] %s124
      %130 = dma.hbm_to_vmem [thread:$0]  %s7, 1024, %s125, [#allocation15], 128, 128, 8
    $region33: #{tpu_custom_call.1} parent=1 // pred_fallthru
      _
    // Predicated region
    $region34: #{tpu_custom_call.1} parent=1 // pred_check
      _
    $region35: #{tpu_custom_call.1} parent=1 // pred_check_branch
      %132 = sbr.rel (0) target = $region37
    $region36: #{tpu_custom_call.1} parent=1 // pred_region
      _
    $region37: #{tpu_custom_call.1} parent=1 // pred_fallthru
      _
    // Predicated region
    $region38: #{tpu_custom_call.1} parent=1 // pred_check
      _
    $region39: #{tpu_custom_call.1} parent=1 // pred_check_branch
      %134 = sbr.rel (0) target = $region41
    $region40: #{tpu_custom_call.1} parent=1 // pred_region
      %s136 = ssub.s32 128, 128
      %137 = vsyncadd [#allocation15], %s136
      %s139 = sshll.u32 [#allocation16], 4
      %s140 = int_to_ptr.vmem [resolvable:$true] %s139
      %142 = dma.hbm_to_vmem [thread:$0]  %s9, 128, %s140, [#allocation15]
    $region41: #{tpu_custom_call.1} parent=1 // pred_fallthru
      _
    // Predicated region
    $region42: #{tpu_custom_call.1} parent=1 // pred_check
      _
    $region43: #{tpu_custom_call.1} parent=1 // pred_check_branch
      %144 = sbr.rel (0) target = $region45
    $region44: #{tpu_custom_call.1} parent=1 // pred_region
      _
    $region45: #{tpu_custom_call.1} parent=1 // pred_fallthru
      _
    // Predicated region
    $region46: #{tpu_custom_call.1} parent=1 // pred_check
      _
    $region47: #{tpu_custom_call.1} parent=1 // pred_check_branch
      %146 = sbr.rel (0) target = $region49
    $region48: #{tpu_custom_call.1} parent=1 // pred_region
      %s148 = ssub.s32 128, 128
      %149 = vsyncadd [#allocation18], %s148
      %s151 = sshll.u32 [#allocation17], 4
      %s152 = int_to_ptr.vmem [resolvable:$true] %s151
      %154 = dma.hbm_to_vmem [thread:$0]  %s11, 128, %s152, [#allocation18]
    $region49: #{tpu_custom_call.1} parent=1 // pred_fallthru
      _
    // Predicated region
    $region50: #{tpu_custom_call.1} parent=1 // pred_check
      _
    $region51: #{tpu_custom_call.1} parent=1 // pred_check_branch
      %156 = sbr.rel (0) target = $region53
    $region52: #{tpu_custom_call.1} parent=1 // pred_region
      _
    $region53: #{tpu_custom_call.1} parent=1 // pred_fallthru
      _
    // Predicated region
    $region54: #{tpu_custom_call.1} parent=1 // pred_check
      _
    $region55: #{tpu_custom_call.1} parent=1 // pred_check_branch
      %158 = sbr.rel (0) target = $region57
    $region56: #{tpu_custom_call.1} parent=1 // pred_region
      %s160 = ssub.s32 512, 512
      %161 = vsyncadd [#allocation18], %s160
      %s162 = sshll.u32 [#allocation19], 4
      %s163 = int_to_ptr.vmem [resolvable:$true] %s162
      %168 = dma.hbm_to_vmem [thread:$0]  %s13, 512, %s163, [#allocation18], 128, 128, 8
    $region57: #{tpu_custom_call.1} parent=1 // pred_fallthru
      _
    // Predicated region
    $region58: #{tpu_custom_call.1} parent=1 // pred_check
      _
    $region59: #{tpu_custom_call.1} parent=1 // pred_check_branch
      %170 = sbr.rel (0) target = $region61
    $region60: #{tpu_custom_call.1} parent=1 // pred_region
      _
    $region61: #{tpu_custom_call.1} parent=1 // pred_fallthru
      _
    // Predicated region
    $region62: #{tpu_custom_call.1} parent=1 // pred_check
      _
    $region63: #{tpu_custom_call.1} parent=1 // pred_check_branch
      %172 = sbr.rel (0) target = $region65
    $region64: #{tpu_custom_call.1} parent=1 // pred_region
      %s174 = ssub.s32 640, 640
      %175 = vsyncadd [#allocation21], %s174
      %s176 = sshll.u32 [#allocation20], 4
      %s177 = int_to_ptr.vmem [resolvable:$true] %s176
      %182 = dma.hbm_to_vmem [thread:$0]  %s15, 640, %s177, [#allocation21], 128, 128, 8
    $region65: #{tpu_custom_call.1} parent=1 // pred_fallthru
      _
    // Predicated region
    $region66: #{tpu_custom_call.1} parent=1 // pred_check
      _
    $region67: #{tpu_custom_call.1} parent=1 // pred_check_branch
      %184 = sbr.rel (0) target = $region69
    $region68: #{tpu_custom_call.1} parent=1 // pred_region
      _
    $region69: #{tpu_custom_call.1} parent=1 // pred_fallthru
      _
    // Predicated region
    $region70: #{tpu_custom_call.1} parent=1 // pred_check
      _
    $region71: #{tpu_custom_call.1} parent=1 // pred_check_branch
      %186 = sbr.rel (0) target = $region73
    $region72: #{tpu_custom_call.1} parent=1 // pred_region
      %187 = dma.done [#allocation3], 256
    $region73: #{tpu_custom_call.1} parent=1 // pred_fallthru
      _
    // Predicated region
    $region74: #{tpu_custom_call.1} parent=1 // pred_check
      _
    $region75: #{tpu_custom_call.1} parent=1 // pred_check_branch
      %189 = sbr.rel (0) target = $region77
    $region76: #{tpu_custom_call.1} parent=1 // pred_region
      %190 = dma.done [#allocation6], 256
    $region77: #{tpu_custom_call.1} parent=1 // pred_fallthru
      _
    // Predicated region
    $region78: #{tpu_custom_call.1} parent=1 // pred_check
      _
    $region79: #{tpu_custom_call.1} parent=1 // pred_check_branch
      %192 = sbr.rel (0) target = $region81
    $region80: #{tpu_custom_call.1} parent=1 // pred_region
      %193 = dma.done [#allocation6], 256
    $region81: #{tpu_custom_call.1} parent=1 // pred_fallthru
      _
    // Predicated region
    $region82: #{tpu_custom_call.1} parent=1 // pred_check
      _
    $region83: #{tpu_custom_call.1} parent=1 // pred_check_branch
      %195 = sbr.rel (0) target = $region85
    $region84: #{tpu_custom_call.1} parent=1 // pred_region
      %196 = dma.done [#allocation9], 256
    $region85: #{tpu_custom_call.1} parent=1 // pred_fallthru
      _
    // Predicated region
    $region86: #{tpu_custom_call.1} parent=1 // pred_check
      _
    $region87: #{tpu_custom_call.1} parent=1 // pred_check_branch
      %198 = sbr.rel (0) target = $region89
    $region88: #{tpu_custom_call.1} parent=1 // pred_region
      %199 = dma.done [#allocation9], 256
    $region89: #{tpu_custom_call.1} parent=1 // pred_fallthru
      _
    // Predicated region
    $region90: #{tpu_custom_call.1} parent=1 // pred_check
      _
    $region91: #{tpu_custom_call.1} parent=1 // pred_check_branch
      %201 = sbr.rel (0) target = $region93
    $region92: #{tpu_custom_call.1} parent=1 // pred_region
      %202 = dma.done [#allocation12], 512
    $region93: #{tpu_custom_call.1} parent=1 // pred_fallthru
      _
    // Predicated region
    $region94: #{tpu_custom_call.1} parent=1 // pred_check
      _
    $region95: #{tpu_custom_call.1} parent=1 // pred_check_branch
      %204 = sbr.rel (0) target = $region97
    $region96: #{tpu_custom_call.1} parent=1 // pred_region
      %205 = dma.done [#allocation12], 16
    $region97: #{tpu_custom_call.1} parent=1 // pred_fallthru
      _
    // Predicated region
    $region98: #{tpu_custom_call.1} parent=1 // pred_check
      _
    $region99: #{tpu_custom_call.1} parent=1 // pred_check_branch
      %207 = sbr.rel (0) target = $region101
    $region100: #{tpu_custom_call.1} parent=1 // pred_region
      %208 = dma.done [#allocation15], 1024
    $region101: #{tpu_custom_call.1} parent=1 // pred_fallthru
      _
    // Predicated region
    $region102: #{tpu_custom_call.1} parent=1 // pred_check
      _
    $region103: #{tpu_custom_call.1} parent=1 // pred_check_branch
      %210 = sbr.rel (0) target = $region105
    $region104: #{tpu_custom_call.1} parent=1 // pred_region
      %211 = dma.done [#allocation15], 128
    $region105: #{tpu_custom_call.1} parent=1 // pred_fallthru
      _
    // Predicated region
    $region106: #{tpu_custom_call.1} parent=1 // pred_check
      _
    $region107: #{tpu_custom_call.1} parent=1 // pred_check_branch
      %213 = sbr.rel (0) target = $region109
    $region108: #{tpu_custom_call.1} parent=1 // pred_region
      %214 = dma.done [#allocation18], 128
    $region109: #{tpu_custom_call.1} parent=1 // pred_fallthru
      _
    // Predicated region
    $region110: #{tpu_custom_call.1} parent=1 // pred_check
      _
    $region111: #{tpu_custom_call.1} parent=1 // pred_check_branch
      %216 = sbr.rel (0) target = $region113
    $region112: #{tpu_custom_call.1} parent=1 // pred_region
      %217 = dma.done [#allocation18], 512
    $region113: #{tpu_custom_call.1} parent=1 // pred_fallthru
      _
    // Predicated region
    $region114: #{tpu_custom_call.1} parent=1 // pred_check
      _
    $region115: #{tpu_custom_call.1} parent=1 // pred_check_branch
      %219 = sbr.rel (0) target = $region117
    $region116: #{tpu_custom_call.1} parent=1 // pred_region
      %220 = dma.done [#allocation21], 640
    $region117: #{tpu_custom_call.1} parent=1 // pred_fallthru
      _
    %v221 = vld [vmem:[#allocation2] sm:$0xff]
    %v222 = vld [vmem:[#allocation2 + $0x8] sm:$0xff]
    %v223 = vld [vmem:[#allocation11] sm:$0xff]
    %v224 = vld [vmem:[#allocation11 + $0x8] sm:$0xff]
    %v225 = vld [vmem:[#allocation11 + $0x10] sm:$0xff]
    %v226 = vld [vmem:[#allocation11 + $0x18] sm:$0xff]
    %v227 = vld [vmem:[#allocation13] sm:$0x1]
    %v229 = vlaneseq
    %v230 = vshrl.u32 %v229, 7
    %v231 = vsub.s32 0, %v230
    %v232 = vrot.slane %v227, %v231
    %vm234 = vcmask 261120
    %v236 = vsel %vm234, %v221, 0
    %v239 = vsel %vm234, %v222, 0
    %241 = vmatprep.subr.mxu0 0.0
    %242 = vmatpush1.msra.mxu0 0.0
    %243 = vmatprep.subr.mxu0 0.0
    %244 = vmatpush1.msra.mxu0 0.0
    %245 = vmatprep.subr.mxu0 0.0
    %246 = vmatpush1.msra.mxu0 0.0
    %247 = vmatprep.subr.mxu0 0.0
    %248 = vmatpush1.msra.mxu0 0.0
    %249 = vmatprep.subr.mxu0 0.0
    %250 = vmatpush1.msra.mxu0 0.0
    %251 = vmatprep.subr.mxu0 0.0
    %252 = vmatpush1.msra.mxu0 0.0
    %253 = vmatprep.subr.mxu0 0.0
    %254 = vmatpush1.msra.mxu0 0.0
    %255 = vmatprep.subr.mxu0 0.0
    %256 = vmatpush1.msra.mxu0 0.0
    %257 = vmatprep.subr.mxu0 0.0
    %258 = vmatpush1.msra.mxu0 0.0
    %259 = vmatprep.subr.mxu0 0.0
    %260 = vmatpush1.msra.mxu0 0.0
    %261 = vmatprep.subr.mxu0 0.0
    %262 = vmatpush1.msra.mxu0 0.0
    %263 = vmatprep.subr.mxu0 0.0
    %264 = vmatpush1.msra.mxu0 0.0
    %265 = vmatprep.subr.mxu0 0.0
    %266 = vmatpush1.msra.mxu0 %v226
    %267 = vmatprep.subr.mxu0 0.0
    %268 = vmatpush1.msra.mxu0 %v225
    %269 = vmatprep.subr.mxu0 0.0
    %270 = vmatpush1.msra.mxu0 %v224
    %271 = vmatprep.subr.mxu0 0.0
    %272 = vmatpush1.msra.mxu0 %v223
    %273 = vmatprep.subr.mxu0 0.0
    %274 = vmatpush2.msra.mxu0 0.0
    %275 = vmatprep.subr.mxu0 0.0
    %276 = vmatpush2.msra.mxu0 0.0
    %277 = vmatprep.subr.mxu0 0.0
    %278 = vmatpush2.msra.mxu0 0.0
    %279 = vmatprep.subr.mxu0 0.0
    %280 = vmatpush2.msra.mxu0 0.0
    %281 = vmatprep.subr.mxu0 0.0
    %282 = vmatpush2.msra.mxu0 0.0
    %283 = vmatprep.subr.mxu0 0.0
    %284 = vmatpush2.msra.mxu0 0.0
    %285 = vmatprep.subr.mxu0 0.0
    %286 = vmatpush2.msra.mxu0 0.0
    %287 = vmatprep.subr.mxu0 0.0
    %288 = vmatpush2.msra.mxu0 0.0
    %289 = vmatprep.subr.mxu0 0.0
    %290 = vmatpush2.msra.mxu0 0.0
    %291 = vmatprep.subr.mxu0 0.0
    %292 = vmatpush2.msra.mxu0 0.0
    %293 = vmatprep.subr.mxu0 0.0
    %294 = vmatpush2.msra.mxu0 0.0
    %295 = vmatprep.subr.mxu0 0.0
    %296 = vmatpush2.msra.mxu0 0.0
    %297 = vmatprep.subr.mxu0 0.0
    %298 = vmatpush2.msra.mxu0 0.0
    %299 = vmatprep.subr.mxu0 0.0
    %300 = vmatpush2.msra.mxu0 0.0
    %301 = vmatprep.subr.mxu0 0.0
    %302 = vmatpush2.msra.mxu0 0.0
    %303 = vmatprep.subr.mxu0 0.0
    %304 = vmatpush2.msra.mxu0 0.0
    %305 = vmatprep.mubr.f32.mxu0 0.0
    %306 = vmatmul.mubr.f32.gmra.mxu0 %v236
    %v307 = vpop.f32.mrf.mxu0
    %v308 = vadd.f32 %v232, %v307
    %v309 = vpop.f32.mrf.mxu0
    %310 = vmatprep.mubr.f32.mxu0 0.0
    %311 = vmatmul.mubr.f32.gmra.mxu0 %v239
    %v312 = vpop.f32.mrf.mxu0
    %v313 = vadd.f32 %v232, %v312
    %v314 = vpop.f32.mrf.mxu0
    %315 = vdwg.mxu0
    %v316 = vld [vmem:[#allocation8] sm:$0xff]
    %v317 = vld [vmem:[#allocation8 + $0x8] sm:$0xff]
    %v318 = vld [vmem:[#allocation10] sm:$0xff]
    %v319 = vld [vmem:[#allocation10 + $0x8] sm:$0xff]
    %v320 = vld [vmem:[#allocation7] sm:$0xff]
    %v321 = vld [vmem:[#allocation7 + $0x8] sm:$0xff]
    %vm322 = vcmp.gt.f32.partialorder %v320, 0.0
    %vm323 = vcmp.gt.f32.partialorder %v321, 0.0
    %v324 = vsel %vm322, 1, 0
    %v325 = vsel %vm323, 1, 0
    %326 = vset.pattern.permute.xlu0 0
    %327 = vperm.xlu0 %326, %v324
    %v328 = vpop.permute.xlu0 %327
    %329 = vset.pattern.permute.xlu0 0
    %330 = vperm.xlu0 %329, %v325
    %v331 = vpop.permute.xlu0 %330
    %vm332 = vcmp.eq.s32.totalorder %v328, 1
    %vm333 = vcmp.eq.s32.totalorder %v331, 1
    %334 = vset.pattern.permute.xlu0 1
    %335 = vperm.xlu0 %334, %v324
    %v336 = vpop.permute.xlu0 %335
    %337 = vset.pattern.permute.xlu0 1
    %338 = vperm.xlu0 %337, %v325
    %v339 = vpop.permute.xlu0 %338
    %vm340 = vcmp.eq.s32.totalorder %v336, 1
    %vm341 = vcmp.eq.s32.totalorder %v339, 1
    %342 = vset.pattern.permute.xlu0 2
    %343 = vperm.xlu0 %342, %v324
    %v344 = vpop.permute.xlu0 %343
    %345 = vset.pattern.permute.xlu0 2
    %346 = vperm.xlu0 %345, %v325
    %v347 = vpop.permute.xlu0 %346
    %vm348 = vcmp.eq.s32.totalorder %v344, 1
    %vm349 = vcmp.eq.s32.totalorder %v347, 1
    %350 = vset.pattern.permute.xlu0 3
    %351 = vperm.xlu0 %350, %v324
    %v352 = vpop.permute.xlu0 %351
    %353 = vset.pattern.permute.xlu0 3
    %354 = vperm.xlu0 %353, %v325
    %v355 = vpop.permute.xlu0 %354
    %vm356 = vcmp.eq.s32.totalorder %v352, 1
    %vm357 = vcmp.eq.s32.totalorder %v355, 1
    %358 = vset.pattern.permute.xlu0 4
    %359 = vperm.xlu0 %358, %v324
    %v360 = vpop.permute.xlu0 %359
    %361 = vset.pattern.permute.xlu0 4
    %362 = vperm.xlu0 %361, %v325
    %v363 = vpop.permute.xlu0 %362
    %vm364 = vcmp.eq.s32.totalorder %v360, 1
    %vm365 = vcmp.eq.s32.totalorder %v363, 1
    %366 = vset.pattern.permute.xlu0 5
    %367 = vperm.xlu0 %366, %v324
    %v368 = vpop.permute.xlu0 %367
    %369 = vset.pattern.permute.xlu0 5
    %370 = vperm.xlu0 %369, %v325
    %v371 = vpop.permute.xlu0 %370
    %vm372 = vcmp.eq.s32.totalorder %v368, 1
    %vm373 = vcmp.eq.s32.totalorder %v371, 1
    %374 = vset.pattern.permute.xlu0 6
    %375 = vperm.xlu0 %374, %v324
    %v376 = vpop.permute.xlu0 %375
    %377 = vset.pattern.permute.xlu0 6
    %378 = vperm.xlu0 %377, %v325
    %v379 = vpop.permute.xlu0 %378
    %vm380 = vcmp.eq.s32.totalorder %v376, 1
    %vm381 = vcmp.eq.s32.totalorder %v379, 1
    %382 = vset.pattern.permute.xlu0 7
    %383 = vperm.xlu0 %382, %v324
    %v384 = vpop.permute.xlu0 %383
    %385 = vset.pattern.permute.xlu0 7
    %386 = vperm.xlu0 %385, %v325
    %v387 = vpop.permute.xlu0 %386
    %vm388 = vcmp.eq.s32.totalorder %v384, 1
    %vm389 = vcmp.eq.s32.totalorder %v387, 1
    %390 = vset.pattern.permute.xlu0 8
    %391 = vperm.xlu0 %390, %v324
    %v392 = vpop.permute.xlu0 %391
    %393 = vset.pattern.permute.xlu0 8
    %394 = vperm.xlu0 %393, %v325
    %v395 = vpop.permute.xlu0 %394
    %vm396 = vcmp.eq.s32.totalorder %v392, 1
    %vm397 = vcmp.eq.s32.totalorder %v395, 1
    %398 = vset.pattern.permute.xlu0 9
    %399 = vperm.xlu0 %398, %v324
    %v400 = vpop.permute.xlu0 %399
    %401 = vset.pattern.permute.xlu0 9
    %402 = vperm.xlu0 %401, %v325
    %v403 = vpop.permute.xlu0 %402
    %vm404 = vcmp.eq.s32.totalorder %v400, 1
    %vm405 = vcmp.eq.s32.totalorder %v403, 1
    %406 = vset.pattern.permute.xlu0 10
    %407 = vperm.xlu0 %406, %v324
    %v408 = vpop.permute.xlu0 %407
    %409 = vset.pattern.permute.xlu0 10
    %410 = vperm.xlu0 %409, %v325
    %v411 = vpop.permute.xlu0 %410
    %vm412 = vcmp.eq.s32.totalorder %v408, 1
    %vm413 = vcmp.eq.s32.totalorder %v411, 1
    %414 = vset.pattern.permute.xlu0 11
    %415 = vperm.xlu0 %414, %v324
    %v416 = vpop.permute.xlu0 %415
    %417 = vset.pattern.permute.xlu0 11
    %418 = vperm.xlu0 %417, %v325
    %v419 = vpop.permute.xlu0 %418
    %vm420 = vcmp.eq.s32.totalorder %v416, 1
    %vm421 = vcmp.eq.s32.totalorder %v419, 1
    %422 = vset.pattern.permute.xlu0 12
    %423 = vperm.xlu0 %422, %v324
    %v424 = vpop.permute.xlu0 %423
    %425 = vset.pattern.permute.xlu0 12
    %426 = vperm.xlu0 %425, %v325
    %v427 = vpop.permute.xlu0 %426
    %vm428 = vcmp.eq.s32.totalorder %v424, 1
    %vm429 = vcmp.eq.s32.totalorder %v427, 1
    %430 = vset.pattern.permute.xlu0 13
    %431 = vperm.xlu0 %430, %v324
    %v432 = vpop.permute.xlu0 %431
    %433 = vset.pattern.permute.xlu0 13
    %434 = vperm.xlu0 %433, %v325
    %v435 = vpop.permute.xlu0 %434
    %vm436 = vcmp.eq.s32.totalorder %v432, 1
    %vm437 = vcmp.eq.s32.totalorder %v435, 1
    %438 = vset.pattern.permute.xlu0 14
    %439 = vperm.xlu0 %438, %v324
    %v440 = vpop.permute.xlu0 %439
    %441 = vset.pattern.permute.xlu0 14
    %442 = vperm.xlu0 %441, %v325
    %v443 = vpop.permute.xlu0 %442
    %vm444 = vcmp.eq.s32.totalorder %v440, 1
    %vm445 = vcmp.eq.s32.totalorder %v443, 1
    %446 = vset.pattern.permute.xlu0 15
    %447 = vperm.xlu0 %446, %v324
    %v448 = vpop.permute.xlu0 %447
    %449 = vset.pattern.permute.xlu0 15
    %450 = vperm.xlu0 %449, %v325
    %v451 = vpop.permute.xlu0 %450
    %vm452 = vcmp.eq.s32.totalorder %v448, 1
    %vm453 = vcmp.eq.s32.totalorder %v451, 1
    %v454 = vlaneseq
    %v455 = vshrl.u32 %v454, 7
    %v456 = vsub.s32 0, %v455
    %v457 = vrot.slane %v316, %v456
    %v458 = vsel %vm332, %v457, 2147483647
    %v459 = vsel %vm333, %v457, 2147483647
    %v460 = vlaneseq
    %v461 = vshrl.u32 %v460, 7
    %v462 = vsub.s32 0, %v461
    %v463 = vrot.slane %v318, %v462
    %vm464 = vcmp.gt.s32.totalorder %v463, 0
    %v465 = vsel %vm464, %v463, 0
    %v466 = vsel %vm332, %v465, 0
    %v467 = vsel %vm333, %v465, 0
    %v468 = vlaneseq
    %v469 = vshrl.u32 %v468, 7
    %v470 = vsub.s32 1, %v469
    %v471 = vrot.slane %v316, %v470
    %vm472 = vcmp.lt.s32.totalorder %v458, %v471
    %v473 = vsel %vm472, %v458, %v471
    %vm474 = vcmp.lt.s32.totalorder %v459, %v471
    %v475 = vsel %vm474, %v459, %v471
    %v476 = vsel %vm340, %v473, %v458
    %v477 = vsel %vm341, %v475, %v459
    %v478 = vlaneseq
    %v479 = vshrl.u32 %v478, 7
    %v480 = vsub.s32 1, %v479
    %v481 = vrot.slane %v318, %v480
    %vm482 = vcmp.gt.s32.totalorder %v466, %v481
    %v483 = vsel %vm482, %v466, %v481
    %vm484 = vcmp.gt.s32.totalorder %v467, %v481
    %v485 = vsel %vm484, %v467, %v481
    %v486 = vsel %vm340, %v483, %v466
    %v487 = vsel %vm341, %v485, %v467
    %v488 = vlaneseq
    %v489 = vshrl.u32 %v488, 7
    %v490 = vsub.s32 2, %v489
    %v491 = vrot.slane %v316, %v490
    %vm492 = vcmp.lt.s32.totalorder %v476, %v491
    %v493 = vsel %vm492, %v476, %v491
    %vm494 = vcmp.lt.s32.totalorder %v477, %v491
    %v495 = vsel %vm494, %v477, %v491
    %v496 = vsel %vm348, %v493, %v476
    %v497 = vsel %vm349, %v495, %v477
    %v498 = vlaneseq
    %v499 = vshrl.u32 %v498, 7
    %v500 = vsub.s32 2, %v499
    %v501 = vrot.slane %v318, %v500
    %vm502 = vcmp.gt.s32.totalorder %v486, %v501
    %v503 = vsel %vm502, %v486, %v501
    %vm504 = vcmp.gt.s32.totalorder %v487, %v501
    %v505 = vsel %vm504, %v487, %v501
    %v506 = vsel %vm348, %v503, %v486
    %v507 = vsel %vm349, %v505, %v487
    %v508 = vlaneseq
    %v509 = vshrl.u32 %v508, 7
    %v510 = vsub.s32 3, %v509
    %v511 = vrot.slane %v316, %v510
    %vm512 = vcmp.lt.s32.totalorder %v496, %v511
    %v513 = vsel %vm512, %v496, %v511
    %vm514 = vcmp.lt.s32.totalorder %v497, %v511
    %v515 = vsel %vm514, %v497, %v511
    %v516 = vsel %vm356, %v513, %v496
    %v517 = vsel %vm357, %v515, %v497
    %v518 = vlaneseq
    %v519 = vshrl.u32 %v518, 7
    %v520 = vsub.s32 3, %v519
    %v521 = vrot.slane %v318, %v520
    %vm522 = vcmp.gt.s32.totalorder %v506, %v521
    %v523 = vsel %vm522, %v506, %v521
    %vm524 = vcmp.gt.s32.totalorder %v507, %v521
    %v525 = vsel %vm524, %v507, %v521
    %v526 = vsel %vm356, %v523, %v506
    %v527 = vsel %vm357, %v525, %v507
    %v528 = vlaneseq
    %v529 = vshrl.u32 %v528, 7
    %v530 = vsub.s32 4, %v529
    %v531 = vrot.slane %v316, %v530
    %vm532 = vcmp.lt.s32.totalorder %v516, %v531
    %v533 = vsel %vm532, %v516, %v531
    %vm534 = vcmp.lt.s32.totalorder %v517, %v531
    %v535 = vsel %vm534, %v517, %v531
    %v536 = vsel %vm364, %v533, %v516
    %v537 = vsel %vm365, %v535, %v517
    %v538 = vlaneseq
    %v539 = vshrl.u32 %v538, 7
    %v540 = vsub.s32 4, %v539
    %v541 = vrot.slane %v318, %v540
    %vm542 = vcmp.gt.s32.totalorder %v526, %v541
    %v543 = vsel %vm542, %v526, %v541
    %vm544 = vcmp.gt.s32.totalorder %v527, %v541
    %v545 = vsel %vm544, %v527, %v541
    %v546 = vsel %vm364, %v543, %v526
    %v547 = vsel %vm365, %v545, %v527
    %v548 = vlaneseq
    %v549 = vshrl.u32 %v548, 7
    %v550 = vsub.s32 5, %v549
    %v551 = vrot.slane %v316, %v550
    %vm552 = vcmp.lt.s32.totalorder %v536, %v551
    %v553 = vsel %vm552, %v536, %v551
    %vm554 = vcmp.lt.s32.totalorder %v537, %v551
    %v555 = vsel %vm554, %v537, %v551
    %v556 = vsel %vm372, %v553, %v536
    %v557 = vsel %vm373, %v555, %v537
    %v558 = vlaneseq
    %v559 = vshrl.u32 %v558, 7
    %v560 = vsub.s32 5, %v559
    %v561 = vrot.slane %v318, %v560
    %vm562 = vcmp.gt.s32.totalorder %v546, %v561
    %v563 = vsel %vm562, %v546, %v561
    %vm564 = vcmp.gt.s32.totalorder %v547, %v561
    %v565 = vsel %vm564, %v547, %v561
    %v566 = vsel %vm372, %v563, %v546
    %v567 = vsel %vm373, %v565, %v547
    %v568 = vlaneseq
    %v569 = vshrl.u32 %v568, 7
    %v570 = vsub.s32 6, %v569
    %v571 = vrot.slane %v316, %v570
    %vm572 = vcmp.lt.s32.totalorder %v556, %v571
    %v573 = vsel %vm572, %v556, %v571
    %vm574 = vcmp.lt.s32.totalorder %v557, %v571
    %v575 = vsel %vm574, %v557, %v571
    %v576 = vsel %vm380, %v573, %v556
    %v577 = vsel %vm381, %v575, %v557
    %v578 = vlaneseq
    %v579 = vshrl.u32 %v578, 7
    %v580 = vsub.s32 6, %v579
    %v581 = vrot.slane %v318, %v580
    %vm582 = vcmp.gt.s32.totalorder %v566, %v581
    %v583 = vsel %vm582, %v566, %v581
    %vm584 = vcmp.gt.s32.totalorder %v567, %v581
    %v585 = vsel %vm584, %v567, %v581
    %v586 = vsel %vm380, %v583, %v566
    %v587 = vsel %vm381, %v585, %v567
    %v588 = vlaneseq
    %v589 = vshrl.u32 %v588, 7
    %v590 = vsub.s32 7, %v589
    %v591 = vrot.slane %v316, %v590
    %vm592 = vcmp.lt.s32.totalorder %v576, %v591
    %v593 = vsel %vm592, %v576, %v591
    %vm594 = vcmp.lt.s32.totalorder %v577, %v591
    %v595 = vsel %vm594, %v577, %v591
    %v596 = vsel %vm388, %v593, %v576
    %v597 = vsel %vm389, %v595, %v577
    %v598 = vlaneseq
    %v599 = vshrl.u32 %v598, 7
    %v600 = vsub.s32 7, %v599
    %v601 = vrot.slane %v318, %v600
    %vm602 = vcmp.gt.s32.totalorder %v586, %v601
    %v603 = vsel %vm602, %v586, %v601
    %vm604 = vcmp.gt.s32.totalorder %v587, %v601
    %v605 = vsel %vm604, %v587, %v601
    %v606 = vsel %vm388, %v603, %v586
    %v607 = vsel %vm389, %v605, %v587
    %v608 = vlaneseq
    %v609 = vshrl.u32 %v608, 7
    %v610 = vsub.s32 0, %v609
    %v611 = vrot.slane %v317, %v610
    %vm612 = vcmp.lt.s32.totalorder %v596, %v611
    %v613 = vsel %vm612, %v596, %v611
    %vm614 = vcmp.lt.s32.totalorder %v597, %v611
    %v615 = vsel %vm614, %v597, %v611
    %v616 = vsel %vm396, %v613, %v596
    %v617 = vsel %vm397, %v615, %v597
    %v618 = vlaneseq
    %v619 = vshrl.u32 %v618, 7
    %v620 = vsub.s32 0, %v619
    %v621 = vrot.slane %v319, %v620
    %vm622 = vcmp.gt.s32.totalorder %v606, %v621
    %v623 = vsel %vm622, %v606, %v621
    %vm624 = vcmp.gt.s32.totalorder %v607, %v621
    %v625 = vsel %vm624, %v607, %v621
    %v626 = vsel %vm396, %v623, %v606
    %v627 = vsel %vm397, %v625, %v607
    %v628 = vlaneseq
    %v629 = vshrl.u32 %v628, 7
    %v630 = vsub.s32 1, %v629
    %v631 = vrot.slane %v317, %v630
    %vm632 = vcmp.lt.s32.totalorder %v616, %v631
    %v633 = vsel %vm632, %v616, %v631
    %vm634 = vcmp.lt.s32.totalorder %v617, %v631
    %v635 = vsel %vm634, %v617, %v631
    %v636 = vsel %vm404, %v633, %v616
    %v637 = vsel %vm405, %v635, %v617
    %v638 = vlaneseq
    %v639 = vshrl.u32 %v638, 7
    %v640 = vsub.s32 1, %v639
    %v641 = vrot.slane %v319, %v640
    %vm642 = vcmp.gt.s32.totalorder %v626, %v641
    %v643 = vsel %vm642, %v626, %v641
    %vm644 = vcmp.gt.s32.totalorder %v627, %v641
    %v645 = vsel %vm644, %v627, %v641
    %v646 = vsel %vm404, %v643, %v626
    %v647 = vsel %vm405, %v645, %v627
    %v648 = vlaneseq
    %v649 = vshrl.u32 %v648, 7
    %v650 = vsub.s32 2, %v649
    %v651 = vrot.slane %v317, %v650
    %vm652 = vcmp.lt.s32.totalorder %v636, %v651
    %v653 = vsel %vm652, %v636, %v651
    %vm654 = vcmp.lt.s32.totalorder %v637, %v651
    %v655 = vsel %vm654, %v637, %v651
    %v656 = vsel %vm412, %v653, %v636
    %v657 = vsel %vm413, %v655, %v637
    %v658 = vlaneseq
    %v659 = vshrl.u32 %v658, 7
    %v660 = vsub.s32 2, %v659
    %v661 = vrot.slane %v319, %v660
    %vm662 = vcmp.gt.s32.totalorder %v646, %v661
    %v663 = vsel %vm662, %v646, %v661
    %vm664 = vcmp.gt.s32.totalorder %v647, %v661
    %v665 = vsel %vm664, %v647, %v661
    %v666 = vsel %vm412, %v663, %v646
    %v667 = vsel %vm413, %v665, %v647
    %v668 = vlaneseq
    %v669 = vshrl.u32 %v668, 7
    %v670 = vsub.s32 3, %v669
    %v671 = vrot.slane %v317, %v670
    %vm672 = vcmp.lt.s32.totalorder %v656, %v671
    %v673 = vsel %vm672, %v656, %v671
    %vm674 = vcmp.lt.s32.totalorder %v657, %v671
    %v675 = vsel %vm674, %v657, %v671
    %v676 = vsel %vm420, %v673, %v656
    %v677 = vsel %vm421, %v675, %v657
    %v678 = vlaneseq
    %v679 = vshrl.u32 %v678, 7
    %v680 = vsub.s32 3, %v679
    %v681 = vrot.slane %v319, %v680
    %vm682 = vcmp.gt.s32.totalorder %v666, %v681
    %v683 = vsel %vm682, %v666, %v681
    %vm684 = vcmp.gt.s32.totalorder %v667, %v681
    %v685 = vsel %vm684, %v667, %v681
    %v686 = vsel %vm420, %v683, %v666
    %v687 = vsel %vm421, %v685, %v667
    %v688 = vlaneseq
    %v689 = vshrl.u32 %v688, 7
    %v690 = vsub.s32 4, %v689
    %v691 = vrot.slane %v317, %v690
    %vm692 = vcmp.lt.s32.totalorder %v676, %v691
    %v693 = vsel %vm692, %v676, %v691
    %vm694 = vcmp.lt.s32.totalorder %v677, %v691
    %v695 = vsel %vm694, %v677, %v691
    %v696 = vsel %vm428, %v693, %v676
    %v697 = vsel %vm429, %v695, %v677
    %v698 = vlaneseq
    %v699 = vshrl.u32 %v698, 7
    %v700 = vsub.s32 4, %v699
    %v701 = vrot.slane %v319, %v700
    %vm702 = vcmp.gt.s32.totalorder %v686, %v701
    %v703 = vsel %vm702, %v686, %v701
    %vm704 = vcmp.gt.s32.totalorder %v687, %v701
    %v705 = vsel %vm704, %v687, %v701
    %v706 = vsel %vm428, %v703, %v686
    %v707 = vsel %vm429, %v705, %v687
    %v708 = vlaneseq
    %v709 = vshrl.u32 %v708, 7
    %v710 = vsub.s32 5, %v709
    %v711 = vrot.slane %v317, %v710
    %vm712 = vcmp.lt.s32.totalorder %v696, %v711
    %v713 = vsel %vm712, %v696, %v711
    %vm714 = vcmp.lt.s32.totalorder %v697, %v711
    %v715 = vsel %vm714, %v697, %v711
    %v716 = vsel %vm436, %v713, %v696
    %v717 = vsel %vm437, %v715, %v697
    %v718 = vlaneseq
    %v719 = vshrl.u32 %v718, 7
    %v720 = vsub.s32 5, %v719
    %v721 = vrot.slane %v319, %v720
    %vm722 = vcmp.gt.s32.totalorder %v706, %v721
    %v723 = vsel %vm722, %v706, %v721
    %vm724 = vcmp.gt.s32.totalorder %v707, %v721
    %v725 = vsel %vm724, %v707, %v721
    %v726 = vsel %vm436, %v723, %v706
    %v727 = vsel %vm437, %v725, %v707
    %v728 = vlaneseq
    %v729 = vshrl.u32 %v728, 7
    %v730 = vsub.s32 6, %v729
    %v731 = vrot.slane %v317, %v730
    %vm732 = vcmp.lt.s32.totalorder %v716, %v731
    %v733 = vsel %vm732, %v716, %v731
    %vm734 = vcmp.lt.s32.totalorder %v717, %v731
    %v735 = vsel %vm734, %v717, %v731
    %v736 = vsel %vm444, %v733, %v716
    %v737 = vsel %vm445, %v735, %v717
    %v738 = vlaneseq
    %v739 = vshrl.u32 %v738, 7
    %v740 = vsub.s32 6, %v739
    %v741 = vrot.slane %v319, %v740
    %vm742 = vcmp.gt.s32.totalorder %v726, %v741
    %v743 = vsel %vm742, %v726, %v741
    %vm744 = vcmp.gt.s32.totalorder %v727, %v741
    %v745 = vsel %vm744, %v727, %v741
    %v746 = vsel %vm444, %v743, %v726
    %v747 = vsel %vm445, %v745, %v727
    %v748 = vlaneseq
    %v749 = vshrl.u32 %v748, 7
    %v750 = vsub.s32 7, %v749
    %v751 = vrot.slane %v317, %v750
    %vm752 = vcmp.lt.s32.totalorder %v736, %v751
    %v753 = vsel %vm752, %v736, %v751
    %vm754 = vcmp.lt.s32.totalorder %v737, %v751
    %v755 = vsel %vm754, %v737, %v751
    %v756 = vsel %vm452, %v753, %v736
    %v757 = vsel %vm453, %v755, %v737
    %v758 = vlaneseq
    %v759 = vshrl.u32 %v758, 7
    %v760 = vsub.s32 7, %v759
    %v761 = vrot.slane %v319, %v760
    %vm762 = vcmp.gt.s32.totalorder %v746, %v761
    %v763 = vsel %vm762, %v746, %v761
    %vm764 = vcmp.gt.s32.totalorder %v747, %v761
    %v765 = vsel %vm764, %v747, %v761
    %v766 = vsel %vm452, %v763, %v746
    %v767 = vsel %vm453, %v765, %v747
    %768 = vst [vmem:[#allocation23] sm:$0xff] %v756
    %769 = vst [vmem:[#allocation23 + $0x8] sm:$0xff] %v757
    %v770 = vcvt.s32.f32 %v766
    %v771 = vcvt.s32.f32 %v767
    %v772 = vsub.f32 0.0, %v770
    %v773 = vsub.f32 0.0, %v771
    %v774 = vpow.pop %v772
    %v775 = vpow.pop %v773
    %vm776 = vcmask 130048
    %v777 = vsel %vm776, %v774, 0.0
    %778 = vadd.xlane.f32.xlu0 %v777
    %v779 = vpop.xlane.xlu0 %778
    %v780 = vsel %vm776, %v775, 0.0
    %781 = vadd.xlane.f32.xlu0 %v780
    %v782 = vpop.xlane.xlu0 %781
    %v783 = vrcp.pop %v779
    %v784 = vmul.f32 172.288, %v783
    %v785 = vrcp.pop %v782
    %v786 = vmul.f32 172.288, %v785
    %v787 = vld [vmem:[#allocation14] sm:$0xff]
    %v788 = vld [vmem:[#allocation14 + $0x8] sm:$0xff]
    %v789 = vld [vmem:[#allocation14 + $0x10] sm:$0xff]
    %v790 = vld [vmem:[#allocation14 + $0x18] sm:$0xff]
    %v792 = vsel %vm234, %v308, 0
    %v795 = vsel %vm234, %v313, 0
    %797 = vmatprep.subr.mxu0 0.0
    %798 = vmatpush1.msra.mxu0 0.0
    %799 = vmatprep.subr.mxu0 0.0
    %800 = vmatpush1.msra.mxu0 0.0
    %801 = vmatprep.subr.mxu0 0.0
    %802 = vmatpush1.msra.mxu0 0.0
    %803 = vmatprep.subr.mxu0 0.0
    %804 = vmatpush1.msra.mxu0 0.0
    %805 = vmatprep.subr.mxu0 0.0
    %806 = vmatpush1.msra.mxu0 0.0
    %807 = vmatprep.subr.mxu0 0.0
    %808 = vmatpush1.msra.mxu0 0.0
    %809 = vmatprep.subr.mxu0 0.0
    %810 = vmatpush1.msra.mxu0 0.0
    %811 = vmatprep.subr.mxu0 0.0
    %812 = vmatpush1.msra.mxu0 0.0
    %813 = vmatprep.subr.mxu0 0.0
    %814 = vmatpush1.msra.mxu0 0.0
    %815 = vmatprep.subr.mxu0 0.0
    %816 = vmatpush1.msra.mxu0 0.0
    %817 = vmatprep.subr.mxu0 0.0
    %818 = vmatpush1.msra.mxu0 0.0
    %819 = vmatprep.subr.mxu0 0.0
    %820 = vmatpush1.msra.mxu0 0.0
    %821 = vmatprep.subr.mxu0 0.0
    %822 = vmatpush1.msra.mxu0 %v790
    %823 = vmatprep.subr.mxu0 0.0
    %824 = vmatpush1.msra.mxu0 %v789
    %825 = vmatprep.subr.mxu0 0.0
    %826 = vmatpush1.msra.mxu0 %v788
    %827 = vmatprep.subr.mxu0 0.0
    %828 = vmatpush1.msra.mxu0 %v787
    %829 = vmatprep.subr.mxu0 0.0
    %830 = vmatpush2.msra.mxu0 0.0
    %831 = vmatprep.subr.mxu0 0.0
    %832 = vmatpush2.msra.mxu0 0.0
    %833 = vmatprep.subr.mxu0 0.0
    %834 = vmatpush2.msra.mxu0 0.0
    %835 = vmatprep.subr.mxu0 0.0
    %836 = vmatpush2.msra.mxu0 0.0
    %837 = vmatprep.subr.mxu0 0.0
    %838 = vmatpush2.msra.mxu0 0.0
    %839 = vmatprep.subr.mxu0 0.0
    %840 = vmatpush2.msra.mxu0 0.0
    %841 = vmatprep.subr.mxu0 0.0
    %842 = vmatpush2.msra.mxu0 0.0
    %843 = vmatprep.subr.mxu0 0.0
    %844 = vmatpush2.msra.mxu0 0.0
    %845 = vmatprep.subr.mxu0 0.0
    %846 = vmatpush2.msra.mxu0 0.0
    %847 = vmatprep.subr.mxu0 0.0
    %848 = vmatpush2.msra.mxu0 0.0
    %849 = vmatprep.subr.mxu0 0.0
    %850 = vmatpush2.msra.mxu0 0.0
    %851 = vmatprep.subr.mxu0 0.0
    %852 = vmatpush2.msra.mxu0 0.0
    %853 = vmatprep.subr.mxu0 0.0
    %854 = vmatpush2.msra.mxu0 0.0
    %855 = vmatprep.subr.mxu0 0.0
    %856 = vmatpush2.msra.mxu0 0.0
    %857 = vmatprep.subr.mxu0 0.0
    %858 = vmatpush2.msra.mxu0 0.0
    %859 = vmatprep.subr.mxu0 0.0
    %860 = vmatpush2.msra.mxu0 0.0
    %861 = vmatprep.mubr.f32.mxu0 0.0
    %862 = vmatmul.mubr.f32.gmra.mxu0 %v792
    %v863 = vpop.f32.mrf.mxu0
    %v864 = vadd.f32 0.0, %v863
    %v865 = vpop.f32.mrf.mxu0
    %866 = vmatprep.mubr.f32.mxu0 0.0
    %867 = vmatmul.mubr.f32.gmra.mxu0 %v795
    %v868 = vpop.f32.mrf.mxu0
    %v869 = vadd.f32 0.0, %v868
    %v870 = vpop.f32.mrf.mxu0
    %871 = vdwg.mxu0
    %v872 = vld [vmem:[#allocation5] sm:$0xff]
    %v873 = vld [vmem:[#allocation5 + $0x8] sm:$0xff]
    %v874 = vld [vmem:[%s8] sm:$0x1]
    %v876 = vlaneseq
    %v877 = vshrl.u32 %v876, 7
    %v878 = vsub.s32 0, %v877
    %v879 = vrot.slane %v874, %v878
    %v882 = vsel %vm776, %v872, 0
    %v885 = vsel %vm776, %v873, 0
    %887 = vmatprep.subr.mxu0 0.0
    %888 = vmatpush1.msra.mxu0 0.0
    %889 = vmatprep.subr.mxu0 0.0
    %890 = vmatpush1.msra.mxu0 0.0
    %891 = vmatprep.subr.mxu0 0.0
    %892 = vmatpush1.msra.mxu0 0.0
    %893 = vmatprep.subr.mxu0 0.0
    %894 = vmatpush1.msra.mxu0 0.0
    %895 = vmatprep.subr.mxu0 0.0
    %896 = vmatpush1.msra.mxu0 0.0
    %897 = vmatprep.subr.mxu0 0.0
    %898 = vmatpush1.msra.mxu0 0.0
    %899 = vmatprep.subr.mxu0 0.0
    %900 = vmatpush1.msra.mxu0 0.0
    %901 = vmatprep.subr.mxu0 0.0
    %902 = vmatpush1.msra.mxu0 0.0
    %903 = vmatprep.subr.mxu0 0.0
    %904 = vmatpush1.msra.mxu0 0.0
    %905 = vmatprep.subr.mxu0 0.0
    %906 = vmatpush1.msra.mxu0 0.0
    %907 = vmatprep.subr.mxu0 0.0
    %908 = vmatpush1.msra.mxu0 0.0
    %909 = vmatprep.subr.mxu0 0.0
    %910 = vmatpush1.msra.mxu0 0.0
    %911 = vmatprep.subr.mxu0 0.0
    %912 = vmatpush1.msra.mxu0 0.0
    %913 = vmatprep.subr.mxu0 0.0
    %914 = vmatpush1.msra.mxu0 0.0
    %915 = vmatprep.subr.mxu0 0.0
    %916 = vmatpush1.msra.mxu0 %v869
    %917 = vmatprep.subr.mxu0 0.0
    %918 = vmatpush1.msra.mxu0 %v864
    %919 = vmatprep.subr.mxu0 0.0
    %920 = vmatpush2.msra.mxu0 0.0
    %921 = vmatprep.subr.mxu0 0.0
    %922 = vmatpush2.msra.mxu0 0.0
    %923 = vmatprep.subr.mxu0 0.0
    %924 = vmatpush2.msra.mxu0 0.0
    %925 = vmatprep.subr.mxu0 0.0
    %926 = vmatpush2.msra.mxu0 0.0
    %927 = vmatprep.subr.mxu0 0.0
    %928 = vmatpush2.msra.mxu0 0.0
    %929 = vmatprep.subr.mxu0 0.0
    %930 = vmatpush2.msra.mxu0 0.0
    %931 = vmatprep.subr.mxu0 0.0
    %932 = vmatpush2.msra.mxu0 0.0
    %933 = vmatprep.subr.mxu0 0.0
    %934 = vmatpush2.msra.mxu0 0.0
    %935 = vmatprep.subr.mxu0 0.0
    %936 = vmatpush2.msra.mxu0 0.0
    %937 = vmatprep.subr.mxu0 0.0
    %938 = vmatpush2.msra.mxu0 0.0
    %939 = vmatprep.subr.mxu0 0.0
    %940 = vmatpush2.msra.mxu0 0.0
    %941 = vmatprep.subr.mxu0 0.0
    %942 = vmatpush2.msra.mxu0 0.0
    %943 = vmatprep.subr.mxu0 0.0
    %944 = vmatpush2.msra.mxu0 0.0
    %945 = vmatprep.subr.mxu0 0.0
    %946 = vmatpush2.msra.mxu0 0.0
    %947 = vmatprep.subr.mxu0 0.0
    %948 = vmatpush2.msra.mxu0 0.0
    %949 = vmatprep.subr.mxu0 0.0
    %950 = vmatpush2.msra.mxu0 0.0
    %951 = vmatprep.mubr.f32.mxu0 0.0
    %952 = vmatmul.mubr.f32.gmra.mxu0 %v882
    %v953 = vpop.f32.mrf.mxu0
    %v954 = vadd.f32 %v879, %v953
    %v955 = vpop.f32.mrf.mxu0
    %956 = vmatprep.mubr.f32.mxu0 0.0
    %957 = vmatmul.mubr.f32.gmra.mxu0 %v885
    %v958 = vpop.f32.mrf.mxu0
    %v959 = vadd.f32 %v879, %v958
    %v960 = vpop.f32.mrf.mxu0
    %961 = vdwg.mxu0
    %v962 = vmax.f32 %v954, 0.0
    %v963 = vmax.f32 %v959, 0.0
    %v964 = vadd.f32 %v308, %v962
    %v965 = vadd.f32 %v313, %v963
    %v966 = vlaneseq
    %v967 = vshrl.u32 %v966, 7
    %v968 = vsub.s32 0, %v967
    %v969 = vrot.slane %v756, %v968
    %v970 = vsel %vm332, %v969, 2147483647
    %v971 = vsel %vm333, %v969, 2147483647
    %v972 = vlaneseq
    %v973 = vshrl.u32 %v972, 7
    %v974 = vsub.s32 0, %v973
    %v975 = vrot.slane %v766, %v974
    %vm976 = vcmp.gt.s32.totalorder %v975, 0
    %v977 = vsel %vm976, %v975, 0
    %v978 = vsel %vm332, %v977, 0
    %v979 = vsel %vm333, %v977, 0
    %v980 = vlaneseq
    %v981 = vshrl.u32 %v980, 7
    %v982 = vsub.s32 1, %v981
    %v983 = vrot.slane %v756, %v982
    %vm984 = vcmp.lt.s32.totalorder %v970, %v983
    %v985 = vsel %vm984, %v970, %v983
    %vm986 = vcmp.lt.s32.totalorder %v971, %v983
    %v987 = vsel %vm986, %v971, %v983
    %v988 = vsel %vm340, %v985, %v970
    %v989 = vsel %vm341, %v987, %v971
    %v990 = vlaneseq
    %v991 = vshrl.u32 %v990, 7
    %v992 = vsub.s32 1, %v991
    %v993 = vrot.slane %v766, %v992
    %vm994 = vcmp.gt.s32.totalorder %v978, %v993
    %v995 = vsel %vm994, %v978, %v993
    %vm996 = vcmp.gt.s32.totalorder %v979, %v993
    %v997 = vsel %vm996, %v979, %v993
    %v998 = vsel %vm340, %v995, %v978
    %v999 = vsel %vm341, %v997, %v979
    %v1000 = vlaneseq
    %v1001 = vshrl.u32 %v1000, 7
    %v1002 = vsub.s32 2, %v1001
    %v1003 = vrot.slane %v756, %v1002
    %vm1004 = vcmp.lt.s32.totalorder %v988, %v1003
    %v1005 = vsel %vm1004, %v988, %v1003
    %vm1006 = vcmp.lt.s32.totalorder %v989, %v1003
    %v1007 = vsel %vm1006, %v989, %v1003
    %v1008 = vsel %vm348, %v1005, %v988
    %v1009 = vsel %vm349, %v1007, %v989
    %v1010 = vlaneseq
    %v1011 = vshrl.u32 %v1010, 7
    %v1012 = vsub.s32 2, %v1011
    %v1013 = vrot.slane %v766, %v1012
    %vm1014 = vcmp.gt.s32.totalorder %v998, %v1013
    %v1015 = vsel %vm1014, %v998, %v1013
    %vm1016 = vcmp.gt.s32.totalorder %v999, %v1013
    %v1017 = vsel %vm1016, %v999, %v1013
    %v1018 = vsel %vm348, %v1015, %v998
    %v1019 = vsel %vm349, %v1017, %v999
    %v1020 = vlaneseq
    %v1021 = vshrl.u32 %v1020, 7
    %v1022 = vsub.s32 3, %v1021
    %v1023 = vrot.slane %v756, %v1022
    %vm1024 = vcmp.lt.s32.totalorder %v1008, %v1023
    %v1025 = vsel %vm1024, %v1008, %v1023
    %vm1026 = vcmp.lt.s32.totalorder %v1009, %v1023
    %v1027 = vsel %vm1026, %v1009, %v1023
    %v1028 = vsel %vm356, %v1025, %v1008
    %v1029 = vsel %vm357, %v1027, %v1009
    %v1030 = vlaneseq
    %v1031 = vshrl.u32 %v1030, 7
    %v1032 = vsub.s32 3, %v1031
    %v1033 = vrot.slane %v766, %v1032
    %vm1034 = vcmp.gt.s32.totalorder %v1018, %v1033
    %v1035 = vsel %vm1034, %v1018, %v1033
    %vm1036 = vcmp.gt.s32.totalorder %v1019, %v1033
    %v1037 = vsel %vm1036, %v1019, %v1033
    %v1038 = vsel %vm356, %v1035, %v1018
    %v1039 = vsel %vm357, %v1037, %v1019
    %v1040 = vlaneseq
    %v1041 = vshrl.u32 %v1040, 7
    %v1042 = vsub.s32 4, %v1041
    %v1043 = vrot.slane %v756, %v1042
    %vm1044 = vcmp.lt.s32.totalorder %v1028, %v1043
    %v1045 = vsel %vm1044, %v1028, %v1043
    %vm1046 = vcmp.lt.s32.totalorder %v1029, %v1043
    %v1047 = vsel %vm1046, %v1029, %v1043
    %v1048 = vsel %vm364, %v1045, %v1028
    %v1049 = vsel %vm365, %v1047, %v1029
    %v1050 = vlaneseq
    %v1051 = vshrl.u32 %v1050, 7
    %v1052 = vsub.s32 4, %v1051
    %v1053 = vrot.slane %v766, %v1052
    %vm1054 = vcmp.gt.s32.totalorder %v1038, %v1053
    %v1055 = vsel %vm1054, %v1038, %v1053
    %vm1056 = vcmp.gt.s32.totalorder %v1039, %v1053
    %v1057 = vsel %vm1056, %v1039, %v1053
    %v1058 = vsel %vm364, %v1055, %v1038
    %v1059 = vsel %vm365, %v1057, %v1039
    %v1060 = vlaneseq
    %v1061 = vshrl.u32 %v1060, 7
    %v1062 = vsub.s32 5, %v1061
    %v1063 = vrot.slane %v756, %v1062
    %vm1064 = vcmp.lt.s32.totalorder %v1048, %v1063
    %v1065 = vsel %vm1064, %v1048, %v1063
    %vm1066 = vcmp.lt.s32.totalorder %v1049, %v1063
    %v1067 = vsel %vm1066, %v1049, %v1063
    %v1068 = vsel %vm372, %v1065, %v1048
    %v1069 = vsel %vm373, %v1067, %v1049
    %v1070 = vlaneseq
    %v1071 = vshrl.u32 %v1070, 7
    %v1072 = vsub.s32 5, %v1071
    %v1073 = vrot.slane %v766, %v1072
    %vm1074 = vcmp.gt.s32.totalorder %v1058, %v1073
    %v1075 = vsel %vm1074, %v1058, %v1073
    %vm1076 = vcmp.gt.s32.totalorder %v1059, %v1073
    %v1077 = vsel %vm1076, %v1059, %v1073
    %v1078 = vsel %vm372, %v1075, %v1058
    %v1079 = vsel %vm373, %v1077, %v1059
    %v1080 = vlaneseq
    %v1081 = vshrl.u32 %v1080, 7
    %v1082 = vsub.s32 6, %v1081
    %v1083 = vrot.slane %v756, %v1082
    %vm1084 = vcmp.lt.s32.totalorder %v1068, %v1083
    %v1085 = vsel %vm1084, %v1068, %v1083
    %vm1086 = vcmp.lt.s32.totalorder %v1069, %v1083
    %v1087 = vsel %vm1086, %v1069, %v1083
    %v1088 = vsel %vm380, %v1085, %v1068
    %v1089 = vsel %vm381, %v1087, %v1069
    %v1090 = vlaneseq
    %v1091 = vshrl.u32 %v1090, 7
    %v1092 = vsub.s32 6, %v1091
    %v1093 = vrot.slane %v766, %v1092
    %vm1094 = vcmp.gt.s32.totalorder %v1078, %v1093
    %v1095 = vsel %vm1094, %v1078, %v1093
    %vm1096 = vcmp.gt.s32.totalorder %v1079, %v1093
    %v1097 = vsel %vm1096, %v1079, %v1093
    %v1098 = vsel %vm380, %v1095, %v1078
    %v1099 = vsel %vm381, %v1097, %v1079
    %v1100 = vlaneseq
    %v1101 = vshrl.u32 %v1100, 7
    %v1102 = vsub.s32 7, %v1101
    %v1103 = vrot.slane %v756, %v1102
    %vm1104 = vcmp.lt.s32.totalorder %v1088, %v1103
    %v1105 = vsel %vm1104, %v1088, %v1103
    %vm1106 = vcmp.lt.s32.totalorder %v1089, %v1103
    %v1107 = vsel %vm1106, %v1089, %v1103
    %v1108 = vsel %vm388, %v1105, %v1088
    %v1109 = vsel %vm389, %v1107, %v1089
    %v1110 = vlaneseq
    %v1111 = vshrl.u32 %v1110, 7
    %v1112 = vsub.s32 7, %v1111
    %v1113 = vrot.slane %v766, %v1112
    %vm1114 = vcmp.gt.s32.totalorder %v1098, %v1113
    %v1115 = vsel %vm1114, %v1098, %v1113
    %vm1116 = vcmp.gt.s32.totalorder %v1099, %v1113
    %v1117 = vsel %vm1116, %v1099, %v1113
    %v1118 = vsel %vm388, %v1115, %v1098
    %v1119 = vsel %vm389, %v1117, %v1099
    %v1120 = vlaneseq
    %v1121 = vshrl.u32 %v1120, 7
    %v1122 = vsub.s32 0, %v1121
    %v1123 = vrot.slane %v757, %v1122
    %vm1124 = vcmp.lt.s32.totalorder %v1108, %v1123
    %v1125 = vsel %vm1124, %v1108, %v1123
    %vm1126 = vcmp.lt.s32.totalorder %v1109, %v1123
    %v1127 = vsel %vm1126, %v1109, %v1123
    %v1128 = vsel %vm396, %v1125, %v1108
    %v1129 = vsel %vm397, %v1127, %v1109
    %v1130 = vlaneseq
    %v1131 = vshrl.u32 %v1130, 7
    %v1132 = vsub.s32 0, %v1131
    %v1133 = vrot.slane %v767, %v1132
    %vm1134 = vcmp.gt.s32.totalorder %v1118, %v1133
    %v1135 = vsel %vm1134, %v1118, %v1133
    %vm1136 = vcmp.gt.s32.totalorder %v1119, %v1133
    %v1137 = vsel %vm1136, %v1119, %v1133
    %v1138 = vsel %vm396, %v1135, %v1118
    %v1139 = vsel %vm397, %v1137, %v1119
    %v1140 = vlaneseq
    %v1141 = vshrl.u32 %v1140, 7
    %v1142 = vsub.s32 1, %v1141
    %v1143 = vrot.slane %v757, %v1142
    %vm1144 = vcmp.lt.s32.totalorder %v1128, %v1143
    %v1145 = vsel %vm1144, %v1128, %v1143
    %vm1146 = vcmp.lt.s32.totalorder %v1129, %v1143
    %v1147 = vsel %vm1146, %v1129, %v1143
    %v1148 = vsel %vm404, %v1145, %v1128
    %v1149 = vsel %vm405, %v1147, %v1129
    %v1150 = vlaneseq
    %v1151 = vshrl.u32 %v1150, 7
    %v1152 = vsub.s32 1, %v1151
    %v1153 = vrot.slane %v767, %v1152
    %vm1154 = vcmp.gt.s32.totalorder %v1138, %v1153
    %v1155 = vsel %vm1154, %v1138, %v1153
    %vm1156 = vcmp.gt.s32.totalorder %v1139, %v1153
    %v1157 = vsel %vm1156, %v1139, %v1153
    %v1158 = vsel %vm404, %v1155, %v1138
    %v1159 = vsel %vm405, %v1157, %v1139
    %v1160 = vlaneseq
    %v1161 = vshrl.u32 %v1160, 7
    %v1162 = vsub.s32 2, %v1161
    %v1163 = vrot.slane %v757, %v1162
    %vm1164 = vcmp.lt.s32.totalorder %v1148, %v1163
    %v1165 = vsel %vm1164, %v1148, %v1163
    %vm1166 = vcmp.lt.s32.totalorder %v1149, %v1163
    %v1167 = vsel %vm1166, %v1149, %v1163
    %v1168 = vsel %vm412, %v1165, %v1148
    %v1169 = vsel %vm413, %v1167, %v1149
    %v1170 = vlaneseq
    %v1171 = vshrl.u32 %v1170, 7
    %v1172 = vsub.s32 2, %v1171
    %v1173 = vrot.slane %v767, %v1172
    %vm1174 = vcmp.gt.s32.totalorder %v1158, %v1173
    %v1175 = vsel %vm1174, %v1158, %v1173
    %vm1176 = vcmp.gt.s32.totalorder %v1159, %v1173
    %v1177 = vsel %vm1176, %v1159, %v1173
    %v1178 = vsel %vm412, %v1175, %v1158
    %v1179 = vsel %vm413, %v1177, %v1159
    %v1180 = vlaneseq
    %v1181 = vshrl.u32 %v1180, 7
    %v1182 = vsub.s32 3, %v1181
    %v1183 = vrot.slane %v757, %v1182
    %vm1184 = vcmp.lt.s32.totalorder %v1168, %v1183
    %v1185 = vsel %vm1184, %v1168, %v1183
    %vm1186 = vcmp.lt.s32.totalorder %v1169, %v1183
    %v1187 = vsel %vm1186, %v1169, %v1183
    %v1188 = vsel %vm420, %v1185, %v1168
    %v1189 = vsel %vm421, %v1187, %v1169
    %v1190 = vlaneseq
    %v1191 = vshrl.u32 %v1190, 7
    %v1192 = vsub.s32 3, %v1191
    %v1193 = vrot.slane %v767, %v1192
    %vm1194 = vcmp.gt.s32.totalorder %v1178, %v1193
    %v1195 = vsel %vm1194, %v1178, %v1193
    %vm1196 = vcmp.gt.s32.totalorder %v1179, %v1193
    %v1197 = vsel %vm1196, %v1179, %v1193
    %v1198 = vsel %vm420, %v1195, %v1178
    %v1199 = vsel %vm421, %v1197, %v1179
    %v1200 = vlaneseq
    %v1201 = vshrl.u32 %v1200, 7
    %v1202 = vsub.s32 4, %v1201
    %v1203 = vrot.slane %v757, %v1202
    %vm1204 = vcmp.lt.s32.totalorder %v1188, %v1203
    %v1205 = vsel %vm1204, %v1188, %v1203
    %vm1206 = vcmp.lt.s32.totalorder %v1189, %v1203
    %v1207 = vsel %vm1206, %v1189, %v1203
    %v1208 = vsel %vm428, %v1205, %v1188
    %v1209 = vsel %vm429, %v1207, %v1189
    %v1210 = vlaneseq
    %v1211 = vshrl.u32 %v1210, 7
    %v1212 = vsub.s32 4, %v1211
    %v1213 = vrot.slane %v767, %v1212
    %vm1214 = vcmp.gt.s32.totalorder %v1198, %v1213
    %v1215 = vsel %vm1214, %v1198, %v1213
    %vm1216 = vcmp.gt.s32.totalorder %v1199, %v1213
    %v1217 = vsel %vm1216, %v1199, %v1213
    %v1218 = vsel %vm428, %v1215, %v1198
    %v1219 = vsel %vm429, %v1217, %v1199
    %v1220 = vlaneseq
    %v1221 = vshrl.u32 %v1220, 7
    %v1222 = vsub.s32 5, %v1221
    %v1223 = vrot.slane %v757, %v1222
    %vm1224 = vcmp.lt.s32.totalorder %v1208, %v1223
    %v1225 = vsel %vm1224, %v1208, %v1223
    %vm1226 = vcmp.lt.s32.totalorder %v1209, %v1223
    %v1227 = vsel %vm1226, %v1209, %v1223
    %v1228 = vsel %vm436, %v1225, %v1208
    %v1229 = vsel %vm437, %v1227, %v1209
    %v1230 = vlaneseq
    %v1231 = vshrl.u32 %v1230, 7
    %v1232 = vsub.s32 5, %v1231
    %v1233 = vrot.slane %v767, %v1232
    %vm1234 = vcmp.gt.s32.totalorder %v1218, %v1233
    %v1235 = vsel %vm1234, %v1218, %v1233
    %vm1236 = vcmp.gt.s32.totalorder %v1219, %v1233
    %v1237 = vsel %vm1236, %v1219, %v1233
    %v1238 = vsel %vm436, %v1235, %v1218
    %v1239 = vsel %vm437, %v1237, %v1219
    %v1240 = vlaneseq
    %v1241 = vshrl.u32 %v1240, 7
    %v1242 = vsub.s32 6, %v1241
    %v1243 = vrot.slane %v757, %v1242
    %vm1244 = vcmp.lt.s32.totalorder %v1228, %v1243
    %v1245 = vsel %vm1244, %v1228, %v1243
    %vm1246 = vcmp.lt.s32.totalorder %v1229, %v1243
    %v1247 = vsel %vm1246, %v1229, %v1243
    %v1248 = vsel %vm444, %v1245, %v1228
    %v1249 = vsel %vm445, %v1247, %v1229
    %v1250 = vlaneseq
    %v1251 = vshrl.u32 %v1250, 7
    %v1252 = vsub.s32 6, %v1251
    %v1253 = vrot.slane %v767, %v1252
    %vm1254 = vcmp.gt.s32.totalorder %v1238, %v1253
    %v1255 = vsel %vm1254, %v1238, %v1253
    %vm1256 = vcmp.gt.s32.totalorder %v1239, %v1253
    %v1257 = vsel %vm1256, %v1239, %v1253
    %v1258 = vsel %vm444, %v1255, %v1238
    %v1259 = vsel %vm445, %v1257, %v1239
    %v1260 = vlaneseq
    %v1261 = vshrl.u32 %v1260, 7
    %v1262 = vsub.s32 7, %v1261
    %v1263 = vrot.slane %v757, %v1262
    %vm1264 = vcmp.lt.s32.totalorder %v1248, %v1263
    %v1265 = vsel %vm1264, %v1248, %v1263
    %vm1266 = vcmp.lt.s32.totalorder %v1249, %v1263
    %v1267 = vsel %vm1266, %v1249, %v1263
    %v1268 = vsel %vm452, %v1265, %v1248
    %v1269 = vsel %vm453, %v1267, %v1249
    %v1270 = vlaneseq
    %v1271 = vshrl.u32 %v1270, 7
    %v1272 = vsub.s32 7, %v1271
    %v1273 = vrot.slane %v767, %v1272
    %vm1274 = vcmp.gt.s32.totalorder %v1258, %v1273
    %v1275 = vsel %vm1274, %v1258, %v1273
    %vm1276 = vcmp.gt.s32.totalorder %v1259, %v1273
    %v1277 = vsel %vm1276, %v1259, %v1273
    %v1278 = vsel %vm452, %v1275, %v1258
    %v1279 = vsel %vm453, %v1277, %v1259
    %s1280 = scalar_lea.vmem [#allocation23], 16
    %1281 = vst [vmem:[%s1280] sm:$0xff] %v1268
    %1282 = vst [vmem:[%s1280 + $0x8] sm:$0xff] %v1269
    %v1283 = vcvt.s32.f32 %v1278
    %v1284 = vcvt.s32.f32 %v1279
    %v1285 = vsub.f32 0.0, %v1283
    %v1286 = vsub.f32 0.0, %v1284
    %v1287 = vpow.pop %v1285
    %v1288 = vpow.pop %v1286
    %v1289 = vsel %vm776, %v1287, 0.0
    %1290 = vadd.xlane.f32.xlu0 %v1289
    %v1291 = vpop.xlane.xlu0 %1290
    %v1292 = vsel %vm776, %v1288, 0.0
    %1293 = vadd.xlane.f32.xlu0 %v1292
    %v1294 = vpop.xlane.xlu0 %1293
    %v1295 = vrcp.pop %v1291
    %v1296 = vmul.f32 172.288, %v1295
    %v1297 = vrcp.pop %v1294
    %v1298 = vmul.f32 172.288, %v1297
    %s1299 = scalar_lea.vmem [#allocation14], 32
    %v1300 = vld [vmem:[%s1299] sm:$0xff]
    %v1301 = vld [vmem:[%s1299 + $0x8] sm:$0xff]
    %v1302 = vld [vmem:[%s1299 + $0x10] sm:$0xff]
    %v1303 = vld [vmem:[%s1299 + $0x18] sm:$0xff]
    %v1305 = vsel %vm234, %v964, 0
    %v1308 = vsel %vm234, %v965, 0
    %1310 = vmatprep.subr.mxu0 0.0
    %1311 = vmatpush1.msra.mxu0 0.0
    %1312 = vmatprep.subr.mxu0 0.0
    %1313 = vmatpush1.msra.mxu0 0.0
    %1314 = vmatprep.subr.mxu0 0.0
    %1315 = vmatpush1.msra.mxu0 0.0
    %1316 = vmatprep.subr.mxu0 0.0
    %1317 = vmatpush1.msra.mxu0 0.0
    %1318 = vmatprep.subr.mxu0 0.0
    %1319 = vmatpush1.msra.mxu0 0.0
    %1320 = vmatprep.subr.mxu0 0.0
    %1321 = vmatpush1.msra.mxu0 0.0
    %1322 = vmatprep.subr.mxu0 0.0
    %1323 = vmatpush1.msra.mxu0 0.0
    %1324 = vmatprep.subr.mxu0 0.0
    %1325 = vmatpush1.msra.mxu0 0.0
    %1326 = vmatprep.subr.mxu0 0.0
    %1327 = vmatpush1.msra.mxu0 0.0
    %1328 = vmatprep.subr.mxu0 0.0
    %1329 = vmatpush1.msra.mxu0 0.0
    %1330 = vmatprep.subr.mxu0 0.0
    %1331 = vmatpush1.msra.mxu0 0.0
    %1332 = vmatprep.subr.mxu0 0.0
    %1333 = vmatpush1.msra.mxu0 0.0
    %1334 = vmatprep.subr.mxu0 0.0
    %1335 = vmatpush1.msra.mxu0 %v1303
    %1336 = vmatprep.subr.mxu0 0.0
    %1337 = vmatpush1.msra.mxu0 %v1302
    %1338 = vmatprep.subr.mxu0 0.0
    %1339 = vmatpush1.msra.mxu0 %v1301
    %1340 = vmatprep.subr.mxu0 0.0
    %1341 = vmatpush1.msra.mxu0 %v1300
    %1342 = vmatprep.subr.mxu0 0.0
    %1343 = vmatpush2.msra.mxu0 0.0
    %1344 = vmatprep.subr.mxu0 0.0
    %1345 = vmatpush2.msra.mxu0 0.0
    %1346 = vmatprep.subr.mxu0 0.0
    %1347 = vmatpush2.msra.mxu0 0.0
    %1348 = vmatprep.subr.mxu0 0.0
    %1349 = vmatpush2.msra.mxu0 0.0
    %1350 = vmatprep.subr.mxu0 0.0
    %1351 = vmatpush2.msra.mxu0 0.0
    %1352 = vmatprep.subr.mxu0 0.0
    %1353 = vmatpush2.msra.mxu0 0.0
    %1354 = vmatprep.subr.mxu0 0.0
    %1355 = vmatpush2.msra.mxu0 0.0
    %1356 = vmatprep.subr.mxu0 0.0
    %1357 = vmatpush2.msra.mxu0 0.0
    %1358 = vmatprep.subr.mxu0 0.0
    %1359 = vmatpush2.msra.mxu0 0.0
    %1360 = vmatprep.subr.mxu0 0.0
    %1361 = vmatpush2.msra.mxu0 0.0
    %1362 = vmatprep.subr.mxu0 0.0
    %1363 = vmatpush2.msra.mxu0 0.0
    %1364 = vmatprep.subr.mxu0 0.0
    %1365 = vmatpush2.msra.mxu0 0.0
    %1366 = vmatprep.subr.mxu0 0.0
    %1367 = vmatpush2.msra.mxu0 0.0
    %1368 = vmatprep.subr.mxu0 0.0
    %1369 = vmatpush2.msra.mxu0 0.0
    %1370 = vmatprep.subr.mxu0 0.0
    %1371 = vmatpush2.msra.mxu0 0.0
    %1372 = vmatprep.subr.mxu0 0.0
    %1373 = vmatpush2.msra.mxu0 0.0
    %1374 = vmatprep.mubr.f32.mxu0 0.0
    %1375 = vmatmul.mubr.f32.gmra.mxu0 %v1305
    %v1376 = vpop.f32.mrf.mxu0
    %v1377 = vadd.f32 0.0, %v1376
    %v1378 = vpop.f32.mrf.mxu0
    %1379 = vmatprep.mubr.f32.mxu0 0.0
    %1380 = vmatmul.mubr.f32.gmra.mxu0 %v1308
    %v1381 = vpop.f32.mrf.mxu0
    %v1382 = vadd.f32 0.0, %v1381
    %v1383 = vpop.f32.mrf.mxu0
    %1384 = vdwg.mxu0
    %v1385 = vld [vmem:[#allocation5] sm:$0xff]
    %v1386 = vld [vmem:[#allocation5 + $0x8] sm:$0xff]
    %s1387 = scalar_lea.vmem %s8, 1
    %v1388 = vld [vmem:[%s1387] sm:$0x1]
    %v1390 = vlaneseq
    %v1391 = vshrl.u32 %v1390, 7
    %v1392 = vsub.s32 0, %v1391
    %v1393 = vrot.slane %v1388, %v1392
    %v1396 = vsel %vm776, %v1385, 0
    %v1399 = vsel %vm776, %v1386, 0
    %1401 = vmatprep.subr.mxu0 0.0
    %1402 = vmatpush1.msra.mxu0 0.0
    %1403 = vmatprep.subr.mxu0 0.0
    %1404 = vmatpush1.msra.mxu0 0.0
    %1405 = vmatprep.subr.mxu0 0.0
    %1406 = vmatpush1.msra.mxu0 0.0
    %1407 = vmatprep.subr.mxu0 0.0
    %1408 = vmatpush1.msra.mxu0 0.0
    %1409 = vmatprep.subr.mxu0 0.0
    %1410 = vmatpush1.msra.mxu0 0.0
    %1411 = vmatprep.subr.mxu0 0.0
    %1412 = vmatpush1.msra.mxu0 0.0
    %1413 = vmatprep.subr.mxu0 0.0
    %1414 = vmatpush1.msra.mxu0 0.0
    %1415 = vmatprep.subr.mxu0 0.0
    %1416 = vmatpush1.msra.mxu0 0.0
    %1417 = vmatprep.subr.mxu0 0.0
    %1418 = vmatpush1.msra.mxu0 0.0
    %1419 = vmatprep.subr.mxu0 0.0
    %1420 = vmatpush1.msra.mxu0 0.0
    %1421 = vmatprep.subr.mxu0 0.0
    %1422 = vmatpush1.msra.mxu0 0.0
    %1423 = vmatprep.subr.mxu0 0.0
    %1424 = vmatpush1.msra.mxu0 0.0
    %1425 = vmatprep.subr.mxu0 0.0
    %1426 = vmatpush1.msra.mxu0 0.0
    %1427 = vmatprep.subr.mxu0 0.0
    %1428 = vmatpush1.msra.mxu0 0.0
    %1429 = vmatprep.subr.mxu0 0.0
    %1430 = vmatpush1.msra.mxu0 %v1382
    %1431 = vmatprep.subr.mxu0 0.0
    %1432 = vmatpush1.msra.mxu0 %v1377
    %1433 = vmatprep.subr.mxu0 0.0
    %1434 = vmatpush2.msra.mxu0 0.0
    %1435 = vmatprep.subr.mxu0 0.0
    %1436 = vmatpush2.msra.mxu0 0.0
    %1437 = vmatprep.subr.mxu0 0.0
    %1438 = vmatpush2.msra.mxu0 0.0
    %1439 = vmatprep.subr.mxu0 0.0
    %1440 = vmatpush2.msra.mxu0 0.0
    %1441 = vmatprep.subr.mxu0 0.0
    %1442 = vmatpush2.msra.mxu0 0.0
    %1443 = vmatprep.subr.mxu0 0.0
    %1444 = vmatpush2.msra.mxu0 0.0
    %1445 = vmatprep.subr.mxu0 0.0
    %1446 = vmatpush2.msra.mxu0 0.0
    %1447 = vmatprep.subr.mxu0 0.0
    %1448 = vmatpush2.msra.mxu0 0.0
    %1449 = vmatprep.subr.mxu0 0.0
    %1450 = vmatpush2.msra.mxu0 0.0
    %1451 = vmatprep.subr.mxu0 0.0
    %1452 = vmatpush2.msra.mxu0 0.0
    %1453 = vmatprep.subr.mxu0 0.0
    %1454 = vmatpush2.msra.mxu0 0.0
    %1455 = vmatprep.subr.mxu0 0.0
    %1456 = vmatpush2.msra.mxu0 0.0
    %1457 = vmatprep.subr.mxu0 0.0
    %1458 = vmatpush2.msra.mxu0 0.0
    %1459 = vmatprep.subr.mxu0 0.0
    %1460 = vmatpush2.msra.mxu0 0.0
    %1461 = vmatprep.subr.mxu0 0.0
    %1462 = vmatpush2.msra.mxu0 0.0
    %1463 = vmatprep.subr.mxu0 0.0
    %1464 = vmatpush2.msra.mxu0 0.0
    %1465 = vmatprep.mubr.f32.mxu0 0.0
    %1466 = vmatmul.mubr.f32.gmra.mxu0 %v1396
    %v1467 = vpop.f32.mrf.mxu0
    %v1468 = vadd.f32 %v1393, %v1467
    %v1469 = vpop.f32.mrf.mxu0
    %1470 = vmatprep.mubr.f32.mxu0 0.0
    %1471 = vmatmul.mubr.f32.gmra.mxu0 %v1399
    %v1472 = vpop.f32.mrf.mxu0
    %v1473 = vadd.f32 %v1393, %v1472
    %v1474 = vpop.f32.mrf.mxu0
    %1475 = vdwg.mxu0
    %v1476 = vmax.f32 %v1468, 0.0
    %v1477 = vmax.f32 %v1473, 0.0
    %v1478 = vadd.f32 %v964, %v1476
    %v1479 = vadd.f32 %v965, %v1477
    %v1480 = vsel %vm234, %v1478, 0.0
    %v1481 = vsel %vm234, %v1479, 0.0
    %1482 = vst [vmem:[#allocation22] sm:$0xff] %v1480
    %1483 = vst [vmem:[#allocation22 + $0x8] sm:$0xff] %v1481
    %1484 = vrot.lane.b32.xlu0 %v1278, 16
    %v1485 = vpop.permute.xlu0 %1484
    %1486 = vrot.lane.b32.xlu0 %v1279, 16
    %v1487 = vpop.permute.xlu0 %1486
    %v1488 = vsel %vm776, %v766, %v1485
    %v1489 = vsel %vm776, %v767, %v1487
    %v1490 = vsel %vm234, %v1488, 0
    %v1491 = vsel %vm234, %v1489, 0
    %1492 = vst [vmem:[#allocation25] sm:$0xff] %v1490
    %1493 = vst [vmem:[#allocation25 + $0x8] sm:$0xff] %v1491
    %vm1494 = vcmask 7168
    %v1495 = vsel %vm1494, %v784, %v1296
    %v1496 = vsel %vm1494, %v786, %v1298
    %vm1497 = vcmask 15360
    %v1498 = vsel %vm1497, %v1495, 0.0
    %v1499 = vsel %vm1497, %v1496, 0.0
    %1500 = vst [vmem:[#allocation26] sm:$0xff] %v1498
    %1501 = vst [vmem:[#allocation26 + $0x8] sm:$0xff] %v1499
    %v1502 = vld [vmem:[#allocation16] sm:$0xff]
    %v1503 = vld [vmem:[#allocation17] sm:$0xff]
    %v1504 = vld [vmem:[%s12] sm:$0x1]
    %v1506 = vlaneseq
    %v1507 = vshrl.u32 %v1506, 7
    %v1508 = vsub.s32 0, %v1507
    %v1509 = vrot.slane %v1504, %v1508
    %vm1511 = vcmask 64512
    %v1513 = vsel %vm1511, %v1502, 0
    %1515 = vmatprep.subr.mxu0 0.0
    %1516 = vmatpush1.msra.mxu0 0.0
    %1517 = vmatprep.subr.mxu0 0.0
    %1518 = vmatpush1.msra.mxu0 0.0
    %1519 = vmatprep.subr.mxu0 0.0
    %1520 = vmatpush1.msra.mxu0 0.0
    %1521 = vmatprep.subr.mxu0 0.0
    %1522 = vmatpush1.msra.mxu0 0.0
    %1523 = vmatprep.subr.mxu0 0.0
    %1524 = vmatpush1.msra.mxu0 0.0
    %1525 = vmatprep.subr.mxu0 0.0
    %1526 = vmatpush1.msra.mxu0 0.0
    %1527 = vmatprep.subr.mxu0 0.0
    %1528 = vmatpush1.msra.mxu0 0.0
    %1529 = vmatprep.subr.mxu0 0.0
    %1530 = vmatpush1.msra.mxu0 0.0
    %1531 = vmatprep.subr.mxu0 0.0
    %1532 = vmatpush1.msra.mxu0 0.0
    %1533 = vmatprep.subr.mxu0 0.0
    %1534 = vmatpush1.msra.mxu0 0.0
    %1535 = vmatprep.subr.mxu0 0.0
    %1536 = vmatpush1.msra.mxu0 0.0
    %1537 = vmatprep.subr.mxu0 0.0
    %1538 = vmatpush1.msra.mxu0 0.0
    %1539 = vmatprep.subr.mxu0 0.0
    %1540 = vmatpush1.msra.mxu0 0.0
    %1541 = vmatprep.subr.mxu0 0.0
    %1542 = vmatpush1.msra.mxu0 0.0
    %1543 = vmatprep.subr.mxu0 0.0
    %1544 = vmatpush1.msra.mxu0 0.0
    %1545 = vmatprep.subr.mxu0 0.0
    %1546 = vmatpush1.msra.mxu0 %v1503
    %1547 = vmatprep.subr.mxu0 0.0
    %1548 = vmatpush2.msra.mxu0 0.0
    %1549 = vmatprep.subr.mxu0 0.0
    %1550 = vmatpush2.msra.mxu0 0.0
    %1551 = vmatprep.subr.mxu0 0.0
    %1552 = vmatpush2.msra.mxu0 0.0
    %1553 = vmatprep.subr.mxu0 0.0
    %1554 = vmatpush2.msra.mxu0 0.0
    %1555 = vmatprep.subr.mxu0 0.0
    %1556 = vmatpush2.msra.mxu0 0.0
    %1557 = vmatprep.subr.mxu0 0.0
    %1558 = vmatpush2.msra.mxu0 0.0
    %1559 = vmatprep.subr.mxu0 0.0
    %1560 = vmatpush2.msra.mxu0 0.0
    %1561 = vmatprep.subr.mxu0 0.0
    %1562 = vmatpush2.msra.mxu0 0.0
    %1563 = vmatprep.subr.mxu0 0.0
    %1564 = vmatpush2.msra.mxu0 0.0
    %1565 = vmatprep.subr.mxu0 0.0
    %1566 = vmatpush2.msra.mxu0 0.0
    %1567 = vmatprep.subr.mxu0 0.0
    %1568 = vmatpush2.msra.mxu0 0.0
    %1569 = vmatprep.subr.mxu0 0.0
    %1570 = vmatpush2.msra.mxu0 0.0
    %1571 = vmatprep.subr.mxu0 0.0
    %1572 = vmatpush2.msra.mxu0 0.0
    %1573 = vmatprep.subr.mxu0 0.0
    %1574 = vmatpush2.msra.mxu0 0.0
    %1575 = vmatprep.subr.mxu0 0.0
    %1576 = vmatpush2.msra.mxu0 0.0
    %1577 = vmatprep.subr.mxu0 0.0
    %1578 = vmatpush2.msra.mxu0 0.0
    %1579 = vmatprep.mubr.f32.mxu0 0.0
    %1580 = vmatmul.mubr.f32.gmra.mxu0 %v1513
    %v1581 = vpop.f32.mrf.mxu0
    %v1582 = vadd.f32 %v1509, %v1581
    %v1583 = vpop.f32.mrf.mxu0
    %1584 = vdwg.mxu0
    %v1585 = vmax.f32 %v1582, 0.0
    %v1586 = vld [vmem:[%s10] sm:$0xff]
    %v1587 = vld [vmem:[%s10 + $0x8] sm:$0xff]
    %v1589 = vsel %vm776, %v1586, 0
    %v1592 = vsel %vm776, %v1587, 0
    %1594 = vmatprep.subr.mxu0 0.0
    %1595 = vmatpush1.msra.mxu0 0.0
    %1596 = vmatprep.subr.mxu0 0.0
    %1597 = vmatpush1.msra.mxu0 0.0
    %1598 = vmatprep.subr.mxu0 0.0
    %1599 = vmatpush1.msra.mxu0 0.0
    %1600 = vmatprep.subr.mxu0 0.0
    %1601 = vmatpush1.msra.mxu0 0.0
    %1602 = vmatprep.subr.mxu0 0.0
    %1603 = vmatpush1.msra.mxu0 0.0
    %1604 = vmatprep.subr.mxu0 0.0
    %1605 = vmatpush1.msra.mxu0 0.0
    %1606 = vmatprep.subr.mxu0 0.0
    %1607 = vmatpush1.msra.mxu0 0.0
    %1608 = vmatprep.subr.mxu0 0.0
    %1609 = vmatpush1.msra.mxu0 0.0
    %1610 = vmatprep.subr.mxu0 0.0
    %1611 = vmatpush1.msra.mxu0 0.0
    %1612 = vmatprep.subr.mxu0 0.0
    %1613 = vmatpush1.msra.mxu0 0.0
    %1614 = vmatprep.subr.mxu0 0.0
    %1615 = vmatpush1.msra.mxu0 0.0
    %1616 = vmatprep.subr.mxu0 0.0
    %1617 = vmatpush1.msra.mxu0 0.0
    %1618 = vmatprep.subr.mxu0 0.0
    %1619 = vmatpush1.msra.mxu0 0.0
    %1620 = vmatprep.subr.mxu0 0.0
    %1621 = vmatpush1.msra.mxu0 0.0
    %1622 = vmatprep.subr.mxu0 0.0
    %1623 = vmatpush1.msra.mxu0 %v1479
    %1624 = vmatprep.subr.mxu0 0.0
    %1625 = vmatpush1.msra.mxu0 %v1478
    %1626 = vmatprep.subr.mxu0 0.0
    %1627 = vmatpush2.msra.mxu0 0.0
    %1628 = vmatprep.subr.mxu0 0.0
    %1629 = vmatpush2.msra.mxu0 0.0
    %1630 = vmatprep.subr.mxu0 0.0
    %1631 = vmatpush2.msra.mxu0 0.0
    %1632 = vmatprep.subr.mxu0 0.0
    %1633 = vmatpush2.msra.mxu0 0.0
    %1634 = vmatprep.subr.mxu0 0.0
    %1635 = vmatpush2.msra.mxu0 0.0
    %1636 = vmatprep.subr.mxu0 0.0
    %1637 = vmatpush2.msra.mxu0 0.0
    %1638 = vmatprep.subr.mxu0 0.0
    %1639 = vmatpush2.msra.mxu0 0.0
    %1640 = vmatprep.subr.mxu0 0.0
    %1641 = vmatpush2.msra.mxu0 0.0
    %1642 = vmatprep.subr.mxu0 0.0
    %1643 = vmatpush2.msra.mxu0 0.0
    %1644 = vmatprep.subr.mxu0 0.0
    %1645 = vmatpush2.msra.mxu0 0.0
    %1646 = vmatprep.subr.mxu0 0.0
    %1647 = vmatpush2.msra.mxu0 0.0
    %1648 = vmatprep.subr.mxu0 0.0
    %1649 = vmatpush2.msra.mxu0 0.0
    %1650 = vmatprep.subr.mxu0 0.0
    %1651 = vmatpush2.msra.mxu0 0.0
    %1652 = vmatprep.subr.mxu0 0.0
    %1653 = vmatpush2.msra.mxu0 0.0
    %1654 = vmatprep.subr.mxu0 0.0
    %1655 = vmatpush2.msra.mxu0 0.0
    %1656 = vmatprep.subr.mxu0 0.0
    %1657 = vmatpush2.msra.mxu0 0.0
    %1658 = vmatprep.mubr.f32.mxu0 0.0
    %1659 = vmatmul.mubr.f32.gmra.mxu0 %v1589
    %v1660 = vpop.f32.mrf.mxu0
    %v1661 = vadd.f32 0.0, %v1660
    %v1662 = vpop.f32.mrf.mxu0
    %1663 = vmatprep.mubr.f32.mxu0 0.0
    %1664 = vmatmul.mubr.f32.gmra.mxu0 %v1592
    %v1665 = vpop.f32.mrf.mxu0
    %v1666 = vadd.f32 0.0, %v1665
    %v1667 = vpop.f32.mrf.mxu0
    %1668 = vdwg.mxu0
    %v1669 = vmul.f32 %v1661, %v1666
    %v1670 = vld [vmem:[#allocation19] sm:$0xff]
    %v1671 = vld [vmem:[#allocation19 + $0x8] sm:$0xff]
    %v1672 = vld [vmem:[#allocation19 + $0x10] sm:$0xff]
    %v1673 = vld [vmem:[#allocation19 + $0x18] sm:$0xff]
    %v1674 = vld [vmem:[%s14] sm:$0x1]
    %v1676 = vlaneseq
    %v1677 = vshrl.u32 %v1676, 7
    %v1678 = vsub.s32 0, %v1677
    %v1679 = vrot.slane %v1674, %v1678
    %v1682 = vsel %vm234, %v1669, 0
    %1684 = vmatprep.subr.mxu0 0.0
    %1685 = vmatpush1.msra.mxu0 0.0
    %1686 = vmatprep.subr.mxu0 0.0
    %1687 = vmatpush1.msra.mxu0 0.0
    %1688 = vmatprep.subr.mxu0 0.0
    %1689 = vmatpush1.msra.mxu0 0.0
    %1690 = vmatprep.subr.mxu0 0.0
    %1691 = vmatpush1.msra.mxu0 0.0
    %1692 = vmatprep.subr.mxu0 0.0
    %1693 = vmatpush1.msra.mxu0 0.0
    %1694 = vmatprep.subr.mxu0 0.0
    %1695 = vmatpush1.msra.mxu0 0.0
    %1696 = vmatprep.subr.mxu0 0.0
    %1697 = vmatpush1.msra.mxu0 0.0
    %1698 = vmatprep.subr.mxu0 0.0
    %1699 = vmatpush1.msra.mxu0 0.0
    %1700 = vmatprep.subr.mxu0 0.0
    %1701 = vmatpush1.msra.mxu0 0.0
    %1702 = vmatprep.subr.mxu0 0.0
    %1703 = vmatpush1.msra.mxu0 0.0
    %1704 = vmatprep.subr.mxu0 0.0
    %1705 = vmatpush1.msra.mxu0 0.0
    %1706 = vmatprep.subr.mxu0 0.0
    %1707 = vmatpush1.msra.mxu0 0.0
    %1708 = vmatprep.subr.mxu0 0.0
    %1709 = vmatpush1.msra.mxu0 %v1673
    %1710 = vmatprep.subr.mxu0 0.0
    %1711 = vmatpush1.msra.mxu0 %v1672
    %1712 = vmatprep.subr.mxu0 0.0
    %1713 = vmatpush1.msra.mxu0 %v1671
    %1714 = vmatprep.subr.mxu0 0.0
    %1715 = vmatpush1.msra.mxu0 %v1670
    %1716 = vmatprep.subr.mxu0 0.0
    %1717 = vmatpush2.msra.mxu0 0.0
    %1718 = vmatprep.subr.mxu0 0.0
    %1719 = vmatpush2.msra.mxu0 0.0
    %1720 = vmatprep.subr.mxu0 0.0
    %1721 = vmatpush2.msra.mxu0 0.0
    %1722 = vmatprep.subr.mxu0 0.0
    %1723 = vmatpush2.msra.mxu0 0.0
    %1724 = vmatprep.subr.mxu0 0.0
    %1725 = vmatpush2.msra.mxu0 0.0
    %1726 = vmatprep.subr.mxu0 0.0
    %1727 = vmatpush2.msra.mxu0 0.0
    %1728 = vmatprep.subr.mxu0 0.0
    %1729 = vmatpush2.msra.mxu0 0.0
    %1730 = vmatprep.subr.mxu0 0.0
    %1731 = vmatpush2.msra.mxu0 0.0
    %1732 = vmatprep.subr.mxu0 0.0
    %1733 = vmatpush2.msra.mxu0 0.0
    %1734 = vmatprep.subr.mxu0 0.0
    %1735 = vmatpush2.msra.mxu0 0.0
    %1736 = vmatprep.subr.mxu0 0.0
    %1737 = vmatpush2.msra.mxu0 0.0
    %1738 = vmatprep.subr.mxu0 0.0
    %1739 = vmatpush2.msra.mxu0 0.0
    %1740 = vmatprep.subr.mxu0 0.0
    %1741 = vmatpush2.msra.mxu0 0.0
    %1742 = vmatprep.subr.mxu0 0.0
    %1743 = vmatpush2.msra.mxu0 0.0
    %1744 = vmatprep.subr.mxu0 0.0
    %1745 = vmatpush2.msra.mxu0 0.0
    %1746 = vmatprep.subr.mxu0 0.0
    %1747 = vmatpush2.msra.mxu0 0.0
    %1748 = vmatprep.mubr.f32.mxu0 0.0
    %1749 = vmatmul.mubr.f32.gmra.mxu0 %v1682
    %v1750 = vpop.f32.mrf.mxu0
    %v1751 = vadd.f32 %v1679, %v1750
    %v1752 = vpop.f32.mrf.mxu0
    %1753 = vdwg.mxu0
    %v1754 = vmax.f32 %v1751, 0.0
    %v1755 = vld [vmem:[#allocation20] sm:$0xff]
    %v1756 = vld [vmem:[#allocation20 + $0x8] sm:$0xff]
    %v1757 = vld [vmem:[#allocation20 + $0x10] sm:$0xff]
    %v1758 = vld [vmem:[#allocation20 + $0x18] sm:$0xff]
    %v1759 = vld [vmem:[#allocation20 + $0x20] sm:$0xff]
    %v1761 = vsel %vm234, %v1754, 0
    %1763 = vmatprep.subr.mxu0 0.0
    %1764 = vmatpush1.msra.mxu0 0.0
    %1765 = vmatprep.subr.mxu0 0.0
    %1766 = vmatpush1.msra.mxu0 0.0
    %1767 = vmatprep.subr.mxu0 0.0
    %1768 = vmatpush1.msra.mxu0 0.0
    %1769 = vmatprep.subr.mxu0 0.0
    %1770 = vmatpush1.msra.mxu0 0.0
    %1771 = vmatprep.subr.mxu0 0.0
    %1772 = vmatpush1.msra.mxu0 0.0
    %1773 = vmatprep.subr.mxu0 0.0
    %1774 = vmatpush1.msra.mxu0 0.0
    %1775 = vmatprep.subr.mxu0 0.0
    %1776 = vmatpush1.msra.mxu0 0.0
    %1777 = vmatprep.subr.mxu0 0.0
    %1778 = vmatpush1.msra.mxu0 0.0
    %1779 = vmatprep.subr.mxu0 0.0
    %1780 = vmatpush1.msra.mxu0 0.0
    %1781 = vmatprep.subr.mxu0 0.0
    %1782 = vmatpush1.msra.mxu0 0.0
    %1783 = vmatprep.subr.mxu0 0.0
    %1784 = vmatpush1.msra.mxu0 0.0
    %1785 = vmatprep.subr.mxu0 0.0
    %1786 = vmatpush1.msra.mxu0 0.0
    %1787 = vmatprep.subr.mxu0 0.0
    %1788 = vmatpush1.msra.mxu0 %v1759
    %1789 = vmatprep.subr.mxu0 0.0
    %1790 = vmatpush1.msra.mxu0 %v1758
    %1791 = vmatprep.subr.mxu0 0.0
    %1792 = vmatpush1.msra.mxu0 %v1757
    %1793 = vmatprep.subr.mxu0 0.0
    %1794 = vmatpush1.msra.mxu0 %v1756
    %1795 = vmatprep.subr.mxu0 0.0
    %1796 = vmatpush2.msra.mxu0 0.0
    %1797 = vmatprep.subr.mxu0 0.0
    %1798 = vmatpush2.msra.mxu0 0.0
    %1799 = vmatprep.subr.mxu0 0.0
    %1800 = vmatpush2.msra.mxu0 0.0
    %1801 = vmatprep.subr.mxu0 0.0
    %1802 = vmatpush2.msra.mxu0 0.0
    %1803 = vmatprep.subr.mxu0 0.0
    %1804 = vmatpush2.msra.mxu0 0.0
    %1805 = vmatprep.subr.mxu0 0.0
    %1806 = vmatpush2.msra.mxu0 0.0
    %1807 = vmatprep.subr.mxu0 0.0
    %1808 = vmatpush2.msra.mxu0 0.0
    %1809 = vmatprep.subr.mxu0 0.0
    %1810 = vmatpush2.msra.mxu0 0.0
    %1811 = vmatprep.subr.mxu0 0.0
    %1812 = vmatpush2.msra.mxu0 0.0
    %1813 = vmatprep.subr.mxu0 0.0
    %1814 = vmatpush2.msra.mxu0 0.0
    %1815 = vmatprep.subr.mxu0 0.0
    %1816 = vmatpush2.msra.mxu0 0.0
    %1817 = vmatprep.subr.mxu0 0.0
    %1818 = vmatpush2.msra.mxu0 0.0
    %1819 = vmatprep.subr.mxu0 0.0
    %1820 = vmatpush2.msra.mxu0 0.0
    %1821 = vmatprep.subr.mxu0 0.0
    %1822 = vmatpush2.msra.mxu0 0.0
    %1823 = vmatprep.subr.mxu0 0.0
    %1824 = vmatpush2.msra.mxu0 0.0
    %1825 = vmatprep.subr.mxu0 0.0
    %1826 = vmatpush2.msra.mxu0 0.0
    %1827 = vmatprep.mubr.f32.mxu0 0.0
    %1828 = vmatmul.mubr.f32.gmra.mxu0 %v1761
    %v1829 = vpop.f32.mrf.mxu0
    %v1830 = vadd.f32 0.0, %v1829
    %v1831 = vpop.f32.mrf.mxu0
    %1832 = vdwg.mxu0
    %v1834 = vsel %vm1511, %v1585, 0
    %1836 = vmatprep.subr.mxu0 0.0
    %1837 = vmatpush1.msra.mxu0 0.0
    %1838 = vmatprep.subr.mxu0 0.0
    %1839 = vmatpush1.msra.mxu0 0.0
    %1840 = vmatprep.subr.mxu0 0.0
    %1841 = vmatpush1.msra.mxu0 0.0
    %1842 = vmatprep.subr.mxu0 0.0
    %1843 = vmatpush1.msra.mxu0 0.0
    %1844 = vmatprep.subr.mxu0 0.0
    %1845 = vmatpush1.msra.mxu0 0.0
    %1846 = vmatprep.subr.mxu0 0.0
    %1847 = vmatpush1.msra.mxu0 0.0
    %1848 = vmatprep.subr.mxu0 0.0
    %1849 = vmatpush1.msra.mxu0 0.0
    %1850 = vmatprep.subr.mxu0 0.0
    %1851 = vmatpush1.msra.mxu0 0.0
    %1852 = vmatprep.subr.mxu0 0.0
    %1853 = vmatpush1.msra.mxu0 0.0
    %1854 = vmatprep.subr.mxu0 0.0
    %1855 = vmatpush1.msra.mxu0 0.0
    %1856 = vmatprep.subr.mxu0 0.0
    %1857 = vmatpush1.msra.mxu0 0.0
    %1858 = vmatprep.subr.mxu0 0.0
    %1859 = vmatpush1.msra.mxu0 0.0
    %1860 = vmatprep.subr.mxu0 0.0
    %1861 = vmatpush1.msra.mxu0 0.0
    %1862 = vmatprep.subr.mxu0 0.0
    %1863 = vmatpush1.msra.mxu0 0.0
    %1864 = vmatprep.subr.mxu0 0.0
    %1865 = vmatpush1.msra.mxu0 0.0
    %1866 = vmatprep.subr.mxu0 0.0
    %1867 = vmatpush1.msra.mxu0 %v1755
    %1868 = vmatprep.subr.mxu0 0.0
    %1869 = vmatpush2.msra.mxu0 0.0
    %1870 = vmatprep.subr.mxu0 0.0
    %1871 = vmatpush2.msra.mxu0 0.0
    %1872 = vmatprep.subr.mxu0 0.0
    %1873 = vmatpush2.msra.mxu0 0.0
    %1874 = vmatprep.subr.mxu0 0.0
    %1875 = vmatpush2.msra.mxu0 0.0
    %1876 = vmatprep.subr.mxu0 0.0
    %1877 = vmatpush2.msra.mxu0 0.0
    %1878 = vmatprep.subr.mxu0 0.0
    %1879 = vmatpush2.msra.mxu0 0.0
    %1880 = vmatprep.subr.mxu0 0.0
    %1881 = vmatpush2.msra.mxu0 0.0
    %1882 = vmatprep.subr.mxu0 0.0
    %1883 = vmatpush2.msra.mxu0 0.0
    %1884 = vmatprep.subr.mxu0 0.0
    %1885 = vmatpush2.msra.mxu0 0.0
    %1886 = vmatprep.subr.mxu0 0.0
    %1887 = vmatpush2.msra.mxu0 0.0
    %1888 = vmatprep.subr.mxu0 0.0
    %1889 = vmatpush2.msra.mxu0 0.0
    %1890 = vmatprep.subr.mxu0 0.0
    %1891 = vmatpush2.msra.mxu0 0.0
    %1892 = vmatprep.subr.mxu0 0.0
    %1893 = vmatpush2.msra.mxu0 0.0
    %1894 = vmatprep.subr.mxu0 0.0
    %1895 = vmatpush2.msra.mxu0 0.0
    %1896 = vmatprep.subr.mxu0 0.0
    %1897 = vmatpush2.msra.mxu0 0.0
    %1898 = vmatprep.subr.mxu0 0.0
    %1899 = vmatpush2.msra.mxu0 0.0
    %1900 = vmatprep.mubr.f32.mxu0 0.0
    %1901 = vmatmul.mubr.f32.gmra.mxu0 %v1834
    %v1902 = vpop.f32.mrf.mxu0
    %v1903 = vadd.f32 %v1830, %v1902
    %v1904 = vpop.f32.mrf.mxu0
    %1905 = vdwg.mxu0
    %v1906 = vld [vmem:[%s16] sm:$0x1]
    %v1908 = vlaneseq
    %v1909 = vshrl.u32 %v1908, 7
    %v1910 = vsub.s32 0, %v1909
    %v1911 = vrot.slane %v1906, %v1910
    %v1913 = vadd.f32 %v1903, %v1911
    %v1914 = vxor.u32 %v1913, 2147483648
    %v1915 = vmul.f32 %v1914, 1.442695
    %v1916 = vpow.pop %v1915
    %v1917 = vadd.f32 %v1916, 1.0
    %v1918 = vrcp.pop %v1917
    %v1919 = vmul.f32 1.0, %v1918
    %1920 = vst [vmem:[#allocation28] sm:$0xff] %v1919
    // Predicated region
    $region118: #{tpu_custom_call.1} parent=1 // pred_check
      _
    $region119: #{tpu_custom_call.1} parent=1 // pred_check_branch
      %1922 = sbr.rel (0) target = $region121
    $region120: #{tpu_custom_call.1} parent=1 // pred_region
      %s1924 = ssub.s32 256, 256
      %1925 = vsyncadd [#allocation4], %s1924
      %s1926 = sshll.u32 [#allocation22], 4
      %s1927 = int_to_ptr.vmem [resolvable:$true] %s1926
      %1932 = dma.vmem_to_hbm [thread:$0]  %s1927, 256, %s17, [#allocation4], 128, 128, 8
    $region121: #{tpu_custom_call.1} parent=1 // pred_fallthru
      _
    // Predicated region
    $region122: #{tpu_custom_call.1} parent=1 // pred_check
      _
    $region123: #{tpu_custom_call.1} parent=1 // pred_check_branch
      %1934 = sbr.rel (0) target = $region125
    $region124: #{tpu_custom_call.1} parent=1 // pred_region
      %s1936 = ssub.s32 512, 512
      %1937 = vsyncadd [#allocation24], %s1936
      %s1938 = sshll.u32 [#allocation23], 4
      %s1939 = int_to_ptr.vmem [resolvable:$true] %s1938
      %1944 = dma.vmem_to_hbm [thread:$0]  %s1939, 512, %s18, [#allocation24], 128, 128, 8
    $region125: #{tpu_custom_call.1} parent=1 // pred_fallthru
      _
    // Predicated region
    $region126: #{tpu_custom_call.1} parent=1 // pred_check
      _
    $region127: #{tpu_custom_call.1} parent=1 // pred_check_branch
      %1946 = sbr.rel (0) target = $region129
    $region128: #{tpu_custom_call.1} parent=1 // pred_region
      %s1948 = ssub.s32 256, 256
      %1949 = vsyncadd [#allocation24], %s1948
      %s1950 = sshll.u32 [#allocation25], 4
      %s1951 = int_to_ptr.vmem [resolvable:$true] %s1950
      %1956 = dma.vmem_to_hbm [thread:$0]  %s1951, 256, %s19, [#allocation24], 128, 128, 8
    $region129: #{tpu_custom_call.1} parent=1 // pred_fallthru
      _
    // Predicated region
    $region130: #{tpu_custom_call.1} parent=1 // pred_check
      _
    $region131: #{tpu_custom_call.1} parent=1 // pred_check_branch
      %1958 = sbr.rel (0) target = $region133
    $region132: #{tpu_custom_call.1} parent=1 // pred_region
      %s1960 = ssub.s32 256, 256
      %1961 = vsyncadd [#allocation27], %s1960
      %s1962 = sshll.u32 [#allocation26], 4
      %s1963 = int_to_ptr.vmem [resolvable:$true] %s1962
      %1968 = dma.vmem_to_hbm [thread:$0]  %s1963, 256, %s20, [#allocation27], 128, 128, 8
    $region133: #{tpu_custom_call.1} parent=1 // pred_fallthru
      _
    // Predicated region
    $region134: #{tpu_custom_call.1} parent=1 // pred_check
      _
    $region135: #{tpu_custom_call.1} parent=1 // pred_check_branch
      %1970 = sbr.rel (0) target = $region137
    $region136: #{tpu_custom_call.1} parent=1 // pred_region
      %s1972 = ssub.s32 128, 128
      %1973 = vsyncadd [#allocation27], %s1972
      %s1975 = sshll.u32 [#allocation28], 4
      %s1976 = int_to_ptr.vmem [resolvable:$true] %s1975
      %1978 = dma.vmem_to_hbm [thread:$0]  %s1976, 128, %s21, [#allocation27]
    $region137: #{tpu_custom_call.1} parent=1 // pred_fallthru
      _
    // Predicated region
    $region138: #{tpu_custom_call.1} parent=1 // pred_check
      _
    $region139: #{tpu_custom_call.1} parent=1 // pred_check_branch
      %1980 = sbr.rel (0) target = $region141
    $region140: #{tpu_custom_call.1} parent=1 // pred_region
      %1981 = dma.done [#allocation4], 256
    $region141: #{tpu_custom_call.1} parent=1 // pred_fallthru
      _
    // Predicated region
    $region142: #{tpu_custom_call.1} parent=1 // pred_check
      _
    $region143: #{tpu_custom_call.1} parent=1 // pred_check_branch
      %1983 = sbr.rel (0) target = $region145
    $region144: #{tpu_custom_call.1} parent=1 // pred_region
      %1984 = dma.done [#allocation24], 512
    $region145: #{tpu_custom_call.1} parent=1 // pred_fallthru
      _
    // Predicated region
    $region146: #{tpu_custom_call.1} parent=1 // pred_check
      _
    $region147: #{tpu_custom_call.1} parent=1 // pred_check_branch
      %1986 = sbr.rel (0) target = $region149
    $region148: #{tpu_custom_call.1} parent=1 // pred_region
      %1987 = dma.done [#allocation24], 256
    $region149: #{tpu_custom_call.1} parent=1 // pred_fallthru
      _
    // Predicated region
    $region150: #{tpu_custom_call.1} parent=1 // pred_check
      _
    $region151: #{tpu_custom_call.1} parent=1 // pred_check_branch
      %1989 = sbr.rel (0) target = $region153
    $region152: #{tpu_custom_call.1} parent=1 // pred_region
      %1990 = dma.done [#allocation27], 256
    $region153: #{tpu_custom_call.1} parent=1 // pred_fallthru
      _
    // Predicated region
    $region154: #{tpu_custom_call.1} parent=1 // pred_check
      _
    $region155: #{tpu_custom_call.1} parent=1 // pred_check_branch
      %1992 = sbr.rel (0) target = $region157
    $region156: #{tpu_custom_call.1} parent=1 // pred_region
      %1993 = dma.done [#allocation27], 128
    $region157: #{tpu_custom_call.1} parent=1 // pred_fallthru
      _
    %1994 = vsyncpa [#allocation3], 1
    %1995 = vsyncpa [#allocation6], 1
    %1996 = vsyncpa [#allocation9], 1
    %1997 = vsyncpa [#allocation12], 1
    %1998 = vsyncpa [#allocation15], 1
    %1999 = vsyncpa [#allocation18], 1
    %2000 = vsyncpa [#allocation21], 1
    %2001 = vsyncpa [#allocation4], 1
    %2002 = vsyncpa [#allocation24], 1
    %2003 = vsyncpa [#allocation27], 1

</llo_original>
